<compile_context>
chip_gen: v5e
topology: v5e:2x2
jax: 0.10.0
libtpu: 0.0.40
codegen_flags: <defaults>
</compile_context>

<pallas_src>
import functools

import jax
import jax.numpy as jnp
from jax.experimental import pallas as pl
from jax.experimental.pallas import tpu as pltpu

LANE = 128


def _round_up(x, m):
    return (x + m - 1) // m * m


# ------------------------------ Pallas kernel ------------------------------ #

def _fused_net1_kernel(x_ref, w1_ref, b1_ref, w2_ref, b2_ref, o_ref):
    # conv1 (k=32, s=1, p=0 over a 32x32 map) == one matmul over the flat image.
    h = jnp.dot(x_ref[...], w1_ref[...], preferred_element_type=jnp.float32)
    h = h + b1_ref[...]                       # (TM, HP) f32
    # global avg-pool over the 1x1 map is identity; then ReLU, then fc1.
    h = jnp.maximum(h, 0.0).astype(jnp.bfloat16)
    o = jnp.dot(h, w2_ref[...], preferred_element_type=jnp.float32)
    o_ref[...] = o + b2_ref[...]              # (TM, CP) f32, lane-dense store


# ------------------------------ wrapper ------------------------------------ #

def net1_forward(x_nchw, params):
    (w1, b1), (wfc, bfc) = params
    N, C, H, W = x_nchw.shape
    hidden = w1.shape[0]
    num_class = wfc.shape[0]
    KH, KW = w1.shape[2], w1.shape[3]
    # TODO(synk): inputs larger than the 32x32 conv kernel would need a real
    # sliding conv + avg-pool; Net1's kernel_size=32 implies 32x32 inputs.
    assert H == KH and W == KW, "expects spatial extent == conv kernel size"

    K = C * H * W                              # 3072 (multiple of 128)
    HP = _round_up(max(hidden, LANE), LANE)    # lane-dense hidden channels
    CP = _round_up(max(num_class, LANE), LANE)  # lane-dense class channels

    # Row (batch) tiling: pad so every block satisfies the (8,128) constraint.
    TM = 256 if N > 256 else _round_up(N, 8)
    Mp = _round_up(N, TM)

    x_flat = x_nchw.reshape(N, K)              # NCHW flatten matches OIHW weight flatten
    x_pad = jnp.zeros((Mp, K), jnp.bfloat16).at[:N].set(x_flat.astype(jnp.bfloat16))

    # conv weight (Cout, Cin, KH, KW) -> (Cin*KH*KW, Cout), zero-padded to 128 cols.
    w1m = jnp.zeros((K, HP), jnp.bfloat16).at[:, :hidden].set(
        w1.reshape(hidden, K).T.astype(jnp.bfloat16))
    b1p = jnp.zeros((1, HP), jnp.float32).at[0, :hidden].set(b1.astype(jnp.float32))

    # fc weight (numClass, hidden) -> (hidden, numClass), zero-padded both ways.
    w2m = jnp.zeros((HP, CP), jnp.bfloat16).at[:hidden, :num_class].set(
        wfc.T.astype(jnp.bfloat16))
    b2p = jnp.zeros((1, CP), jnp.float32).at[0, :num_class].set(bfc.astype(jnp.float32))

    out = pl.pallas_call(
        _fused_net1_kernel,
        out_shape=jax.ShapeDtypeStruct((Mp, CP), jnp.float32),
        grid=(Mp // TM,),
        in_specs=[
            pl.BlockSpec((TM, K), lambda i: (i, 0)),    # per-tile rows of flat input
            pl.BlockSpec((K, HP), lambda i: (0, 0)),    # conv weight (resident)
            pl.BlockSpec((1, HP), lambda i: (0, 0)),    # conv bias
            pl.BlockSpec((HP, CP), lambda i: (0, 0)),   # fc weight (resident)
            pl.BlockSpec((1, CP), lambda i: (0, 0)),    # fc bias
        ],
        out_specs=pl.BlockSpec((TM, CP), lambda i: (i, 0)),
        compiler_params=pltpu.CompilerParams(
            dimension_semantics=("parallel",),
        ),
    )(x_pad, w1m, b1p, w2m, b2p)

    return out[:N, :num_class]


# ------------------------------ pure-JAX reference -------------------------- #

def reference_forward(x, params):
    (w1, b1), (wfc, bfc) = params
    y = jax.lax.conv_general_dilated(
        x, w1, (1, 1), ((0, 0), (0, 0)),
        dimension_numbers=("NCHW", "OIHW", "NCHW"),
        precision=jax.lax.Precision.HIGHEST)
    y = y + b1[None, :, None, None]
    y = jnp.mean(y, axis=(2, 3))               # avg_pool2d over full spatial + squeeze
    y = jnp.maximum(y, 0.0)                    # F.relu before fc1
    return y @ wfc.T + bfc                     # nn.Linear


# ------------------------- deterministic parameters ------------------------- #

def make_params(key, hidden, num_class, in_ch=3, k=32):
    """PyTorch-default inits (uniform +/- 1/sqrt(fan_in)) for conv1 and fc1."""
    k1, k2, k3, k4 = jax.random.split(key, 4)
    bound1 = (in_ch * k * k) ** -0.5
    w1 = jax.random.uniform(k1, (hidden, in_ch, k, k), jnp.float32, -bound1, bound1)
    b1 = jax.random.uniform(k2, (hidden,), jnp.float32, -bound1, bound1)
    bound2 = hidden ** -0.5
    wfc = jax.random.uniform(k3, (num_class, hidden), jnp.float32, -bound2, bound2)
    bfc = jax.random.uniform(k4, (num_class,), jnp.float32, -bound2, bound2)
    return (w1, b1), (wfc, bfc)


# ----------------------------------- main ----------------------------------- #

if __name__ == "__main__":
    batch = 2
    hidden_size = 32
    num_class = 10

    key = jax.random.PRNGKey(0)
    kx, kp = jax.random.split(key)

    # kernel_size=32 in Net1 implies a 32x32 (CIFAR-like) input.
    x = jax.random.normal(kx, (batch, 3, 32, 32), jnp.float32)
    params = make_params(kp, hidden_size, num_class)

    fwd = jax.jit(functools.partial(net1_forward, params=params))
    out = fwd(x)
    jax.block_until_ready(out)
    assert out.shape == (batch, num_class), out.shape

    ref = jax.jit(functools.partial(reference_forward, params=params))(x)
    jax.block_until_ready(ref)
    max_diff = float(jnp.max(jnp.abs(out - ref)))
    assert jnp.allclose(out, ref, atol=2e-2, rtol=2e-2), ("max abs diff", max_diff)

    print("KERNEL_OK")
</pallas_src>

<mosaic_0001>
module attributes {stable_mosaic.version = 11 : i64} {
  func.func @_fused_net1_kernel(%arg0: i32, %arg1: memref<8x3072xbf16, #tpu.memory_space<vmem>>, %arg2: memref<3072x128xbf16, #tpu.memory_space<vmem>>, %arg3: memref<1x128xf32, #tpu.memory_space<vmem>>, %arg4: memref<128x128xbf16, #tpu.memory_space<vmem>>, %arg5: memref<1x128xf32, #tpu.memory_space<vmem>>, %arg6: memref<8x128xf32, #tpu.memory_space<vmem>>) attributes {dimension_semantics = [#tpu.dimension_semantics<parallel>], iteration_bounds = array<i64: 1>, scalar_prefetch = 0 : i64, scratch_operands = 0 : i64, tpu.core_type = #tpu.core_type<tc>, window_params = [{transform_indices = @transform_0, window_bounds = array<i64: 8, 3072>}, {pipeline_mode = #tpu.pipeline_mode<synchronous>, transform_indices = @transform_1, window_bounds = array<i64: 3072, 128>}, {pipeline_mode = #tpu.pipeline_mode<synchronous>, transform_indices = @transform_2, window_bounds = array<i64: 1, 128>}, {pipeline_mode = #tpu.pipeline_mode<synchronous>, transform_indices = @transform_3, window_bounds = array<i64: 128, 128>}, {pipeline_mode = #tpu.pipeline_mode<synchronous>, transform_indices = @transform_4, window_bounds = array<i64: 1, 128>}, {transform_indices = @transform_5, window_bounds = array<i64: 8, 128>}]} {
    %c0 = arith.constant 0 : index
    %c0_0 = arith.constant 0 : index
    %0 = vector.load %arg1[%c0, %c0_0] : memref<8x3072xbf16, #tpu.memory_space<vmem>>, vector<8x3072xbf16>
    %c0_1 = arith.constant 0 : index
    %c0_2 = arith.constant 0 : index
    %1 = vector.load %arg2[%c0_1, %c0_2] : memref<3072x128xbf16, #tpu.memory_space<vmem>>, vector<3072x128xbf16>
    %cst = arith.constant dense<0.000000e+00> : vector<8x128xf32>
    %2 = tpu.matmul %0, %1, %cst {dimension_numbers = #tpu.dot_dimension_numbers<[1], [0], [0], [1], [0, 0, 1, 1], [], []>} : vector<8x3072xbf16>, vector<3072x128xbf16>, vector<8x128xf32> -> vector<8x128xf32>
    %c0_3 = arith.constant 0 : index
    %c0_4 = arith.constant 0 : index
    %3 = vector.load %arg3[%c0_3, %c0_4] : memref<1x128xf32, #tpu.memory_space<vmem>>, vector<1x128xf32>
    %4 = vector.broadcast %3 : vector<1x128xf32> to vector<8x128xf32>
    %5 = arith.addf %2, %4 : vector<8x128xf32>
    %cst_5 = arith.constant 0.000000e+00 : f32
    %6 = vector.broadcast %cst_5 : f32 to vector<8x128xf32>
    %7 = arith.maximumf %5, %6 : vector<8x128xf32>
    %8 = arith.truncf %7 : vector<8x128xf32> to vector<8x128xbf16>
    %c0_6 = arith.constant 0 : index
    %c0_7 = arith.constant 0 : index
    %9 = vector.load %arg4[%c0_6, %c0_7] : memref<128x128xbf16, #tpu.memory_space<vmem>>, vector<128x128xbf16>
    %cst_8 = arith.constant dense<0.000000e+00> : vector<8x128xf32>
    %10 = tpu.matmul %8, %9, %cst_8 {dimension_numbers = #tpu.dot_dimension_numbers<[1], [0], [0], [1], [0, 0, 1, 1], [], []>} : vector<8x128xbf16>, vector<128x128xbf16>, vector<8x128xf32> -> vector<8x128xf32>
    %c0_9 = arith.constant 0 : index
    %c0_10 = arith.constant 0 : index
    %11 = vector.load %arg5[%c0_9, %c0_10] : memref<1x128xf32, #tpu.memory_space<vmem>>, vector<1x128xf32>
    %12 = vector.broadcast %11 : vector<1x128xf32> to vector<8x128xf32>
    %13 = arith.addf %10, %12 : vector<8x128xf32>
    %c0_11 = arith.constant 0 : index
    %c0_12 = arith.constant 0 : index
    %14 = vector.load %arg6[%c0_11, %c0_12] : memref<8x128xf32, #tpu.memory_space<vmem>>, vector<8x128xf32>
    tpu.vector_store %arg6[%c0_11, %c0_12], %13 {strides = array<i32>} : memref<8x128xf32, #tpu.memory_space<vmem>>, vector<8x128xf32>,
    return
  }
  func.func @transform_0(%arg0: i32) -> (i32, i32) {
    %c0_i32 = arith.constant 0 : i32
    %c0_i32_0 = arith.constant 0 : i32
    return %arg0, %c0_i32 : i32, i32
  }
  func.func @transform_1(%arg0: i32) -> (i32, i32) {
    %c0_i32 = arith.constant 0 : i32
    %c0_i32_0 = arith.constant 0 : i32
    %c0_i32_1 = arith.constant 0 : i32
    return %c0_i32, %c0_i32_0 : i32, i32
  }
  func.func @transform_2(%arg0: i32) -> (i32, i32) {
    %c0_i32 = arith.constant 0 : i32
    %c0_i32_0 = arith.constant 0 : i32
    %c0_i32_1 = arith.constant 0 : i32
    return %c0_i32, %c0_i32_0 : i32, i32
  }
  func.func @transform_3(%arg0: i32) -> (i32, i32) {
    %c0_i32 = arith.constant 0 : i32
    %c0_i32_0 = arith.constant 0 : i32
    %c0_i32_1 = arith.constant 0 : i32
    return %c0_i32, %c0_i32_0 : i32, i32
  }
  func.func @transform_4(%arg0: i32) -> (i32, i32) {
    %c0_i32 = arith.constant 0 : i32
    %c0_i32_0 = arith.constant 0 : i32
    %c0_i32_1 = arith.constant 0 : i32
    return %c0_i32, %c0_i32_0 : i32, i32
  }
  func.func @transform_5(%arg0: i32) -> (i32, i32) {
    %c0_i32 = arith.constant 0 : i32
    %c0_i32_0 = arith.constant 0 : i32
    return %arg0, %c0_i32 : i32, i32
  }
}

</mosaic_0001>

<llo_original>
// kernel: net1_forward.1
$region0: #{net1_forward.1}
  #allocation0 [shape = 'u32[]', space=smem, size = 0x4, offset = 0x4, fixed_abs, tag = 'smem constant byte address 0x4 - core index']
  #allocation1 [shape = 'u32[72,128]{1,0:T(1,128)}', space=vmem, size = 0x9000, scoped, tag = 'internal scratch']
  %s0 = inlined_call_operand.vmem [shape: bf16[8,3072], index: 0, kind: input, shape index: {}]
  %s1 = inlined_call_operand.vmem [shape: bf16[3072,128], index: 1, kind: input, shape index: {}]
  %s2 = inlined_call_operand.vmem [shape: f32[1,128], index: 2, kind: input, shape index: {}]
  %s3 = inlined_call_operand.vmem [shape: bf16[128,128], index: 3, kind: input, shape index: {}]
  %s4 = inlined_call_operand.vmem [shape: f32[1,128], index: 4, kind: input, shape index: {}]
  %s5 = inlined_call_operand.vmem [shape: f32[8,128], index: 5, kind: output, shape index: {}]
  %s6 = sld [smem:[#allocation0]]
  $region30: #{net1_forward.1} parent=0
    _
  %s8 = ssub.s32 1, %s6
  %s9 = scalar_select 0, %s8, %s6
  // Predicated region
  $region2: #{net1_forward.1} parent=0 // pred_check
    _
  $region3: #{net1_forward.1} parent=0 // pred_check_branch
    %11 = sbr.rel (0) target = $region5
  $region4: #{net1_forward.1} parent=0 // pred_region
    _
  $region5: #{net1_forward.1} parent=0 // pred_fallthru
    _
  // Predicated region
  $region6: #{net1_forward.1} parent=0 // pred_check
    _
  $region7: #{net1_forward.1} parent=0 // pred_check_branch
    %13 = sbr.rel (0) target = $region9
  $region8: #{net1_forward.1} parent=0 // pred_region
    _
  $region9: #{net1_forward.1} parent=0 // pred_fallthru
    _
  // Predicated region
  $region10: #{net1_forward.1} parent=0 // pred_check
    _
  $region11: #{net1_forward.1} parent=0 // pred_check_branch
    %15 = sbr.rel (0) target = $region13
  $region12: #{net1_forward.1} parent=0 // pred_region
    _
  $region13: #{net1_forward.1} parent=0 // pred_fallthru
    _
  // Predicated region
  $region14: #{net1_forward.1} parent=0 // pred_check
    _
  $region15: #{net1_forward.1} parent=0 // pred_check_branch
    %17 = sbr.rel (0) target = $region17
  $region16: #{net1_forward.1} parent=0 // pred_region
    _
  $region17: #{net1_forward.1} parent=0 // pred_fallthru
    _
  // Predicated region
  $region18: #{net1_forward.1} parent=0 // pred_check
    _
  $region19: #{net1_forward.1} parent=0 // pred_check_branch
    %19 = sbr.rel (0) target = $region21
  $region20: #{net1_forward.1} parent=0 // pred_region
    _
  $region21: #{net1_forward.1} parent=0 // pred_fallthru
    _
  %v20 = vld [vmem:[%s0] sm:$0xff]
  %v21 = vld [vmem:[%s0 + $0x8] sm:$0xff]
  %v22 = vld [vmem:[%s0 + $0x10] sm:$0xff]
  %v23 = vld [vmem:[%s0 + $0x18] sm:$0xff]
  %v24 = vld [vmem:[%s0 + $0x20] sm:$0xff]
  %v25 = vld [vmem:[%s0 + $0x28] sm:$0xff]
  %v26 = vld [vmem:[%s0 + $0x30] sm:$0xff]
  %v27 = vld [vmem:[%s0 + $0x38] sm:$0xff]
  %v28 = vld [vmem:[%s0 + $0x40] sm:$0xff]
  %v29 = vld [vmem:[%s0 + $0x48] sm:$0xff]
  %v30 = vld [vmem:[%s0 + $0x50] sm:$0xff]
  %v31 = vld [vmem:[%s0 + $0x58] sm:$0xff]
  %v32 = vld [vmem:[%s1] sm:$0xf]
  %v33 = vld [vmem:[%s1 + $0x4] sm:$0xf]
  %v34 = vld [vmem:[%s1 + $0x8] sm:$0xf]
  %v35 = vld [vmem:[%s1 + $0xc] sm:$0xf]
  %v36 = vld [vmem:[%s1 + $0x10] sm:$0xf]
  %v37 = vld [vmem:[%s1 + $0x14] sm:$0xf]
  %v38 = vld [vmem:[%s1 + $0x18] sm:$0xf]
  %v39 = vld [vmem:[%s1 + $0x1c] sm:$0xf]
  %v40 = vld [vmem:[%s1 + $0x20] sm:$0xf]
  %v41 = vld [vmem:[%s1 + $0x24] sm:$0xf]
  %v42 = vld [vmem:[%s1 + $0x28] sm:$0xf]
  %v43 = vld [vmem:[%s1 + $0x2c] sm:$0xf]
  %v44 = vld [vmem:[%s1 + $0x30] sm:$0xf]
  %v45 = vld [vmem:[%s1 + $0x34] sm:$0xf]
  %v46 = vld [vmem:[%s1 + $0x38] sm:$0xf]
  %v47 = vld [vmem:[%s1 + $0x3c] sm:$0xf]
  %v48 = vld [vmem:[%s1 + $0x40] sm:$0xf]
  %v49 = vld [vmem:[%s1 + $0x44] sm:$0xf]
  %v50 = vld [vmem:[%s1 + $0x48] sm:$0xf]
  %v51 = vld [vmem:[%s1 + $0x4c] sm:$0xf]
  %v52 = vld [vmem:[%s1 + $0x50] sm:$0xf]
  %v53 = vld [vmem:[%s1 + $0x54] sm:$0xf]
  %v54 = vld [vmem:[%s1 + $0x58] sm:$0xf]
  %v55 = vld [vmem:[%s1 + $0x5c] sm:$0xf]
  %v56 = vld [vmem:[%s1 + $0x60] sm:$0xf]
  %v57 = vld [vmem:[%s1 + $0x64] sm:$0xf]
  %v58 = vld [vmem:[%s1 + $0x68] sm:$0xf]
  %v59 = vld [vmem:[%s1 + $0x6c] sm:$0xf]
  %v60 = vld [vmem:[%s1 + $0x70] sm:$0xf]
  %v61 = vld [vmem:[%s1 + $0x74] sm:$0xf]
  %v62 = vld [vmem:[%s1 + $0x78] sm:$0xf]
  %v63 = vld [vmem:[%s1 + $0x7c] sm:$0xf]
  %v64 = vld [vmem:[%s1 + $0x80] sm:$0xf]
  %v65 = vld [vmem:[%s1 + $0x84] sm:$0xf]
  %v66 = vld [vmem:[%s1 + $0x88] sm:$0xf]
  %v67 = vld [vmem:[%s1 + $0x8c] sm:$0xf]
  %v68 = vld [vmem:[%s1 + $0x90] sm:$0xf]
  %v69 = vld [vmem:[%s1 + $0x94] sm:$0xf]
  %v70 = vld [vmem:[%s1 + $0x98] sm:$0xf]
  %v71 = vld [vmem:[%s1 + $0x9c] sm:$0xf]
  %v72 = vld [vmem:[%s1 + $0xa0] sm:$0xf]
  %v73 = vld [vmem:[%s1 + $0xa4] sm:$0xf]
  %v74 = vld [vmem:[%s1 + $0xa8] sm:$0xf]
  %v75 = vld [vmem:[%s1 + $0xac] sm:$0xf]
  %v76 = vld [vmem:[%s1 + $0xb0] sm:$0xf]
  %v77 = vld [vmem:[%s1 + $0xb4] sm:$0xf]
  %v78 = vld [vmem:[%s1 + $0xb8] sm:$0xf]
  %v79 = vld [vmem:[%s1 + $0xbc] sm:$0xf]
  %v80 = vld [vmem:[%s1 + $0xc0] sm:$0xf]
  %v81 = vld [vmem:[%s1 + $0xc4] sm:$0xf]
  %v82 = vld [vmem:[%s1 + $0xc8] sm:$0xf]
  %v83 = vld [vmem:[%s1 + $0xcc] sm:$0xf]
  %v84 = vld [vmem:[%s1 + $0xd0] sm:$0xf]
  %v85 = vld [vmem:[%s1 + $0xd4] sm:$0xf]
  %v86 = vld [vmem:[%s1 + $0xd8] sm:$0xf]
  %v87 = vld [vmem:[%s1 + $0xdc] sm:$0xf]
  %v88 = vld [vmem:[%s1 + $0xe0] sm:$0xf]
  %v89 = vld [vmem:[%s1 + $0xe4] sm:$0xf]
  %v90 = vld [vmem:[%s1 + $0xe8] sm:$0xf]
  %v91 = vld [vmem:[%s1 + $0xec] sm:$0xf]
  %v92 = vld [vmem:[%s1 + $0xf0] sm:$0xf]
  %v93 = vld [vmem:[%s1 + $0xf4] sm:$0xf]
  %v94 = vld [vmem:[%s1 + $0xf8] sm:$0xf]
  %v95 = vld [vmem:[%s1 + $0xfc] sm:$0xf]
  %v96 = vld [vmem:[%s1 + $0x100] sm:$0xf]
  %v97 = vld [vmem:[%s1 + $0x104] sm:$0xf]
  %v98 = vld [vmem:[%s1 + $0x108] sm:$0xf]
  %v99 = vld [vmem:[%s1 + $0x10c] sm:$0xf]
  %v100 = vld [vmem:[%s1 + $0x110] sm:$0xf]
  %v101 = vld [vmem:[%s1 + $0x114] sm:$0xf]
  %v102 = vld [vmem:[%s1 + $0x118] sm:$0xf]
  %v103 = vld [vmem:[%s1 + $0x11c] sm:$0xf]
  %v104 = vld [vmem:[%s1 + $0x120] sm:$0xf]
  %v105 = vld [vmem:[%s1 + $0x124] sm:$0xf]
  %v106 = vld [vmem:[%s1 + $0x128] sm:$0xf]
  %v107 = vld [vmem:[%s1 + $0x12c] sm:$0xf]
  %v108 = vld [vmem:[%s1 + $0x130] sm:$0xf]
  %v109 = vld [vmem:[%s1 + $0x134] sm:$0xf]
  %v110 = vld [vmem:[%s1 + $0x138] sm:$0xf]
  %v111 = vld [vmem:[%s1 + $0x13c] sm:$0xf]
  %v112 = vld [vmem:[%s1 + $0x140] sm:$0xf]
  %v113 = vld [vmem:[%s1 + $0x144] sm:$0xf]
  %v114 = vld [vmem:[%s1 + $0x148] sm:$0xf]
  %v115 = vld [vmem:[%s1 + $0x14c] sm:$0xf]
  %v116 = vld [vmem:[%s1 + $0x150] sm:$0xf]
  %v117 = vld [vmem:[%s1 + $0x154] sm:$0xf]
  %v118 = vld [vmem:[%s1 + $0x158] sm:$0xf]
  %v119 = vld [vmem:[%s1 + $0x15c] sm:$0xf]
  %v120 = vld [vmem:[%s1 + $0x160] sm:$0xf]
  %v121 = vld [vmem:[%s1 + $0x164] sm:$0xf]
  %v122 = vld [vmem:[%s1 + $0x168] sm:$0xf]
  %v123 = vld [vmem:[%s1 + $0x16c] sm:$0xf]
  %v124 = vld [vmem:[%s1 + $0x170] sm:$0xf]
  %v125 = vld [vmem:[%s1 + $0x174] sm:$0xf]
  %v126 = vld [vmem:[%s1 + $0x178] sm:$0xf]
  %v127 = vld [vmem:[%s1 + $0x17c] sm:$0xf]
  %v128 = vld [vmem:[%s1 + $0x180] sm:$0xf]
  %v129 = vld [vmem:[%s1 + $0x184] sm:$0xf]
  %v130 = vld [vmem:[%s1 + $0x188] sm:$0xf]
  %v131 = vld [vmem:[%s1 + $0x18c] sm:$0xf]
  %v132 = vld [vmem:[%s1 + $0x190] sm:$0xf]
  %v133 = vld [vmem:[%s1 + $0x194] sm:$0xf]
  %v134 = vld [vmem:[%s1 + $0x198] sm:$0xf]
  %v135 = vld [vmem:[%s1 + $0x19c] sm:$0xf]
  %v136 = vld [vmem:[%s1 + $0x1a0] sm:$0xf]
  %v137 = vld [vmem:[%s1 + $0x1a4] sm:$0xf]
  %v138 = vld [vmem:[%s1 + $0x1a8] sm:$0xf]
  %v139 = vld [vmem:[%s1 + $0x1ac] sm:$0xf]
  %v140 = vld [vmem:[%s1 + $0x1b0] sm:$0xf]
  %v141 = vld [vmem:[%s1 + $0x1b4] sm:$0xf]
  %v142 = vld [vmem:[%s1 + $0x1b8] sm:$0xf]
  %v143 = vld [vmem:[%s1 + $0x1bc] sm:$0xf]
  %v144 = vld [vmem:[%s1 + $0x1c0] sm:$0xf]
  %v145 = vld [vmem:[%s1 + $0x1c4] sm:$0xf]
  %v146 = vld [vmem:[%s1 + $0x1c8] sm:$0xf]
  %v147 = vld [vmem:[%s1 + $0x1cc] sm:$0xf]
  %v148 = vld [vmem:[%s1 + $0x1d0] sm:$0xf]
  %v149 = vld [vmem:[%s1 + $0x1d4] sm:$0xf]
  %v150 = vld [vmem:[%s1 + $0x1d8] sm:$0xf]
  %v151 = vld [vmem:[%s1 + $0x1dc] sm:$0xf]
  %v152 = vld [vmem:[%s1 + $0x1e0] sm:$0xf]
  %v153 = vld [vmem:[%s1 + $0x1e4] sm:$0xf]
  %v154 = vld [vmem:[%s1 + $0x1e8] sm:$0xf]
  %v155 = vld [vmem:[%s1 + $0x1ec] sm:$0xf]
  %v156 = vld [vmem:[%s1 + $0x1f0] sm:$0xf]
  %v157 = vld [vmem:[%s1 + $0x1f4] sm:$0xf]
  %v158 = vld [vmem:[%s1 + $0x1f8] sm:$0xf]
  %v159 = vld [vmem:[%s1 + $0x1fc] sm:$0xf]
  %v160 = vld [vmem:[%s1 + $0x200] sm:$0xf]
  %v161 = vld [vmem:[%s1 + $0x204] sm:$0xf]
  %v162 = vld [vmem:[%s1 + $0x208] sm:$0xf]
  %v163 = vld [vmem:[%s1 + $0x20c] sm:$0xf]
  %v164 = vld [vmem:[%s1 + $0x210] sm:$0xf]
  %v165 = vld [vmem:[%s1 + $0x214] sm:$0xf]
  %v166 = vld [vmem:[%s1 + $0x218] sm:$0xf]
  %v167 = vld [vmem:[%s1 + $0x21c] sm:$0xf]
  %v168 = vld [vmem:[%s1 + $0x220] sm:$0xf]
  %v169 = vld [vmem:[%s1 + $0x224] sm:$0xf]
  %v170 = vld [vmem:[%s1 + $0x228] sm:$0xf]
  %v171 = vld [vmem:[%s1 + $0x22c] sm:$0xf]
  %v172 = vld [vmem:[%s1 + $0x230] sm:$0xf]
  %v173 = vld [vmem:[%s1 + $0x234] sm:$0xf]
  %v174 = vld [vmem:[%s1 + $0x238] sm:$0xf]
  %v175 = vld [vmem:[%s1 + $0x23c] sm:$0xf]
  %v176 = vld [vmem:[%s1 + $0x240] sm:$0xf]
  %v177 = vld [vmem:[%s1 + $0x244] sm:$0xf]
  %v178 = vld [vmem:[%s1 + $0x248] sm:$0xf]
  %v179 = vld [vmem:[%s1 + $0x24c] sm:$0xf]
  %v180 = vld [vmem:[%s1 + $0x250] sm:$0xf]
  %v181 = vld [vmem:[%s1 + $0x254] sm:$0xf]
  %v182 = vld [vmem:[%s1 + $0x258] sm:$0xf]
  %v183 = vld [vmem:[%s1 + $0x25c] sm:$0xf]
  %v184 = vld [vmem:[%s1 + $0x260] sm:$0xf]
  %v185 = vld [vmem:[%s1 + $0x264] sm:$0xf]
  %v186 = vld [vmem:[%s1 + $0x268] sm:$0xf]
  %v187 = vld [vmem:[%s1 + $0x26c] sm:$0xf]
  %v188 = vld [vmem:[%s1 + $0x270] sm:$0xf]
  %v189 = vld [vmem:[%s1 + $0x274] sm:$0xf]
  %v190 = vld [vmem:[%s1 + $0x278] sm:$0xf]
  %v191 = vld [vmem:[%s1 + $0x27c] sm:$0xf]
  %v192 = vld [vmem:[%s1 + $0x280] sm:$0xf]
  %v193 = vld [vmem:[%s1 + $0x284] sm:$0xf]
  %v194 = vld [vmem:[%s1 + $0x288] sm:$0xf]
  %v195 = vld [vmem:[%s1 + $0x28c] sm:$0xf]
  %v196 = vld [vmem:[%s1 + $0x290] sm:$0xf]
  %v197 = vld [vmem:[%s1 + $0x294] sm:$0xf]
  %v198 = vld [vmem:[%s1 + $0x298] sm:$0xf]
  %v199 = vld [vmem:[%s1 + $0x29c] sm:$0xf]
  %v200 = vld [vmem:[%s1 + $0x2a0] sm:$0xf]
  %v201 = vld [vmem:[%s1 + $0x2a4] sm:$0xf]
  %v202 = vld [vmem:[%s1 + $0x2a8] sm:$0xf]
  %v203 = vld [vmem:[%s1 + $0x2ac] sm:$0xf]
  %v204 = vld [vmem:[%s1 + $0x2b0] sm:$0xf]
  %v205 = vld [vmem:[%s1 + $0x2b4] sm:$0xf]
  %v206 = vld [vmem:[%s1 + $0x2b8] sm:$0xf]
  %v207 = vld [vmem:[%s1 + $0x2bc] sm:$0xf]
  %v208 = vld [vmem:[%s1 + $0x2c0] sm:$0xf]
  %v209 = vld [vmem:[%s1 + $0x2c4] sm:$0xf]
  %v210 = vld [vmem:[%s1 + $0x2c8] sm:$0xf]
  %v211 = vld [vmem:[%s1 + $0x2cc] sm:$0xf]
  %v212 = vld [vmem:[%s1 + $0x2d0] sm:$0xf]
  %v213 = vld [vmem:[%s1 + $0x2d4] sm:$0xf]
  %v214 = vld [vmem:[%s1 + $0x2d8] sm:$0xf]
  %v215 = vld [vmem:[%s1 + $0x2dc] sm:$0xf]
  %v216 = vld [vmem:[%s1 + $0x2e0] sm:$0xf]
  %v217 = vld [vmem:[%s1 + $0x2e4] sm:$0xf]
  %v218 = vld [vmem:[%s1 + $0x2e8] sm:$0xf]
  %v219 = vld [vmem:[%s1 + $0x2ec] sm:$0xf]
  %v220 = vld [vmem:[%s1 + $0x2f0] sm:$0xf]
  %v221 = vld [vmem:[%s1 + $0x2f4] sm:$0xf]
  %v222 = vld [vmem:[%s1 + $0x2f8] sm:$0xf]
  %v223 = vld [vmem:[%s1 + $0x2fc] sm:$0xf]
  %v224 = vld [vmem:[%s1 + $0x300] sm:$0xf]
  %v225 = vld [vmem:[%s1 + $0x304] sm:$0xf]
  %v226 = vld [vmem:[%s1 + $0x308] sm:$0xf]
  %v227 = vld [vmem:[%s1 + $0x30c] sm:$0xf]
  %v228 = vld [vmem:[%s1 + $0x310] sm:$0xf]
  %v229 = vld [vmem:[%s1 + $0x314] sm:$0xf]
  %v230 = vld [vmem:[%s1 + $0x318] sm:$0xf]
  %v231 = vld [vmem:[%s1 + $0x31c] sm:$0xf]
  %v232 = vld [vmem:[%s1 + $0x320] sm:$0xf]
  %v233 = vld [vmem:[%s1 + $0x324] sm:$0xf]
  %v234 = vld [vmem:[%s1 + $0x328] sm:$0xf]
  %v235 = vld [vmem:[%s1 + $0x32c] sm:$0xf]
  %v236 = vld [vmem:[%s1 + $0x330] sm:$0xf]
  %v237 = vld [vmem:[%s1 + $0x334] sm:$0xf]
  %v238 = vld [vmem:[%s1 + $0x338] sm:$0xf]
  %v239 = vld [vmem:[%s1 + $0x33c] sm:$0xf]
  %v240 = vld [vmem:[%s1 + $0x340] sm:$0xf]
  %v241 = vld [vmem:[%s1 + $0x344] sm:$0xf]
  %v242 = vld [vmem:[%s1 + $0x348] sm:$0xf]
  %v243 = vld [vmem:[%s1 + $0x34c] sm:$0xf]
  %v244 = vld [vmem:[%s1 + $0x350] sm:$0xf]
  %v245 = vld [vmem:[%s1 + $0x354] sm:$0xf]
  %v246 = vld [vmem:[%s1 + $0x358] sm:$0xf]
  %v247 = vld [vmem:[%s1 + $0x35c] sm:$0xf]
  %v248 = vld [vmem:[%s1 + $0x360] sm:$0xf]
  %v249 = vld [vmem:[%s1 + $0x364] sm:$0xf]
  %v250 = vld [vmem:[%s1 + $0x368] sm:$0xf]
  %v251 = vld [vmem:[%s1 + $0x36c] sm:$0xf]
  %v252 = vld [vmem:[%s1 + $0x370] sm:$0xf]
  %v253 = vld [vmem:[%s1 + $0x374] sm:$0xf]
  %v254 = vld [vmem:[%s1 + $0x378] sm:$0xf]
  %v255 = vld [vmem:[%s1 + $0x37c] sm:$0xf]
  %v256 = vld [vmem:[%s1 + $0x380] sm:$0xf]
  %v257 = vld [vmem:[%s1 + $0x384] sm:$0xf]
  %v258 = vld [vmem:[%s1 + $0x388] sm:$0xf]
  %v259 = vld [vmem:[%s1 + $0x38c] sm:$0xf]
  %v260 = vld [vmem:[%s1 + $0x390] sm:$0xf]
  %v261 = vld [vmem:[%s1 + $0x394] sm:$0xf]
  %v262 = vld [vmem:[%s1 + $0x398] sm:$0xf]
  %v263 = vld [vmem:[%s1 + $0x39c] sm:$0xf]
  %v264 = vld [vmem:[%s1 + $0x3a0] sm:$0xf]
  %v265 = vld [vmem:[%s1 + $0x3a4] sm:$0xf]
  %v266 = vld [vmem:[%s1 + $0x3a8] sm:$0xf]
  %v267 = vld [vmem:[%s1 + $0x3ac] sm:$0xf]
  %v268 = vld [vmem:[%s1 + $0x3b0] sm:$0xf]
  %v269 = vld [vmem:[%s1 + $0x3b4] sm:$0xf]
  %v270 = vld [vmem:[%s1 + $0x3b8] sm:$0xf]
  %v271 = vld [vmem:[%s1 + $0x3bc] sm:$0xf]
  %v272 = vld [vmem:[%s1 + $0x3c0] sm:$0xf]
  %v273 = vld [vmem:[%s1 + $0x3c4] sm:$0xf]
  %v274 = vld [vmem:[%s1 + $0x3c8] sm:$0xf]
  %v275 = vld [vmem:[%s1 + $0x3cc] sm:$0xf]
  %v276 = vld [vmem:[%s1 + $0x3d0] sm:$0xf]
  %v277 = vld [vmem:[%s1 + $0x3d4] sm:$0xf]
  %v278 = vld [vmem:[%s1 + $0x3d8] sm:$0xf]
  %v279 = vld [vmem:[%s1 + $0x3dc] sm:$0xf]
  %v280 = vld [vmem:[%s1 + $0x3e0] sm:$0xf]
  %v281 = vld [vmem:[%s1 + $0x3e4] sm:$0xf]
  %v282 = vld [vmem:[%s1 + $0x3e8] sm:$0xf]
  %v283 = vld [vmem:[%s1 + $0x3ec] sm:$0xf]
  %v284 = vld [vmem:[%s1 + $0x3f0] sm:$0xf]
  %v285 = vld [vmem:[%s1 + $0x3f4] sm:$0xf]
  %v286 = vld [vmem:[%s1 + $0x3f8] sm:$0xf]
  %v287 = vld [vmem:[%s1 + $0x3fc] sm:$0xf]
  %v288 = vld [vmem:[%s1 + $0x400] sm:$0xf]
  %v289 = vld [vmem:[%s1 + $0x404] sm:$0xf]
  %v290 = vld [vmem:[%s1 + $0x408] sm:$0xf]
  %v291 = vld [vmem:[%s1 + $0x40c] sm:$0xf]
  %v292 = vld [vmem:[%s1 + $0x410] sm:$0xf]
  %v293 = vld [vmem:[%s1 + $0x414] sm:$0xf]
  %v294 = vld [vmem:[%s1 + $0x418] sm:$0xf]
  %v295 = vld [vmem:[%s1 + $0x41c] sm:$0xf]
  %v296 = vld [vmem:[%s1 + $0x420] sm:$0xf]
  %v297 = vld [vmem:[%s1 + $0x424] sm:$0xf]
  %v298 = vld [vmem:[%s1 + $0x428] sm:$0xf]
  %v299 = vld [vmem:[%s1 + $0x42c] sm:$0xf]
  %v300 = vld [vmem:[%s1 + $0x430] sm:$0xf]
  %v301 = vld [vmem:[%s1 + $0x434] sm:$0xf]
  %v302 = vld [vmem:[%s1 + $0x438] sm:$0xf]
  %v303 = vld [vmem:[%s1 + $0x43c] sm:$0xf]
  %v304 = vld [vmem:[%s1 + $0x440] sm:$0xf]
  %v305 = vld [vmem:[%s1 + $0x444] sm:$0xf]
  %v306 = vld [vmem:[%s1 + $0x448] sm:$0xf]
  %v307 = vld [vmem:[%s1 + $0x44c] sm:$0xf]
  %v308 = vld [vmem:[%s1 + $0x450] sm:$0xf]
  %v309 = vld [vmem:[%s1 + $0x454] sm:$0xf]
  %v310 = vld [vmem:[%s1 + $0x458] sm:$0xf]
  %v311 = vld [vmem:[%s1 + $0x45c] sm:$0xf]
  %v312 = vld [vmem:[%s1 + $0x460] sm:$0xf]
  %v313 = vld [vmem:[%s1 + $0x464] sm:$0xf]
  %v314 = vld [vmem:[%s1 + $0x468] sm:$0xf]
  %v315 = vld [vmem:[%s1 + $0x46c] sm:$0xf]
  %v316 = vld [vmem:[%s1 + $0x470] sm:$0xf]
  %v317 = vld [vmem:[%s1 + $0x474] sm:$0xf]
  %v318 = vld [vmem:[%s1 + $0x478] sm:$0xf]
  %v319 = vld [vmem:[%s1 + $0x47c] sm:$0xf]
  %v320 = vld [vmem:[%s1 + $0x480] sm:$0xf]
  %v321 = vld [vmem:[%s1 + $0x484] sm:$0xf]
  %v322 = vld [vmem:[%s1 + $0x488] sm:$0xf]
  %v323 = vld [vmem:[%s1 + $0x48c] sm:$0xf]
  %v324 = vld [vmem:[%s1 + $0x490] sm:$0xf]
  %v325 = vld [vmem:[%s1 + $0x494] sm:$0xf]
  %v326 = vld [vmem:[%s1 + $0x498] sm:$0xf]
  %v327 = vld [vmem:[%s1 + $0x49c] sm:$0xf]
  %v328 = vld [vmem:[%s1 + $0x4a0] sm:$0xf]
  %v329 = vld [vmem:[%s1 + $0x4a4] sm:$0xf]
  %v330 = vld [vmem:[%s1 + $0x4a8] sm:$0xf]
  %v331 = vld [vmem:[%s1 + $0x4ac] sm:$0xf]
  %v332 = vld [vmem:[%s1 + $0x4b0] sm:$0xf]
  %v333 = vld [vmem:[%s1 + $0x4b4] sm:$0xf]
  %v334 = vld [vmem:[%s1 + $0x4b8] sm:$0xf]
  %v335 = vld [vmem:[%s1 + $0x4bc] sm:$0xf]
  %v336 = vld [vmem:[%s1 + $0x4c0] sm:$0xf]
  %v337 = vld [vmem:[%s1 + $0x4c4] sm:$0xf]
  %v338 = vld [vmem:[%s1 + $0x4c8] sm:$0xf]
  %v339 = vld [vmem:[%s1 + $0x4cc] sm:$0xf]
  %v340 = vld [vmem:[%s1 + $0x4d0] sm:$0xf]
  %v341 = vld [vmem:[%s1 + $0x4d4] sm:$0xf]
  %v342 = vld [vmem:[%s1 + $0x4d8] sm:$0xf]
  %v343 = vld [vmem:[%s1 + $0x4dc] sm:$0xf]
  %v344 = vld [vmem:[%s1 + $0x4e0] sm:$0xf]
  %v345 = vld [vmem:[%s1 + $0x4e4] sm:$0xf]
  %v346 = vld [vmem:[%s1 + $0x4e8] sm:$0xf]
  %v347 = vld [vmem:[%s1 + $0x4ec] sm:$0xf]
  %v348 = vld [vmem:[%s1 + $0x4f0] sm:$0xf]
  %v349 = vld [vmem:[%s1 + $0x4f4] sm:$0xf]
  %v350 = vld [vmem:[%s1 + $0x4f8] sm:$0xf]
  %v351 = vld [vmem:[%s1 + $0x4fc] sm:$0xf]
  %v352 = vld [vmem:[%s1 + $0x500] sm:$0xf]
  %v353 = vld [vmem:[%s1 + $0x504] sm:$0xf]
  %v354 = vld [vmem:[%s1 + $0x508] sm:$0xf]
  %v355 = vld [vmem:[%s1 + $0x50c] sm:$0xf]
  %v356 = vld [vmem:[%s1 + $0x510] sm:$0xf]
  %v357 = vld [vmem:[%s1 + $0x514] sm:$0xf]
  %v358 = vld [vmem:[%s1 + $0x518] sm:$0xf]
  %v359 = vld [vmem:[%s1 + $0x51c] sm:$0xf]
  %v360 = vld [vmem:[%s1 + $0x520] sm:$0xf]
  %v361 = vld [vmem:[%s1 + $0x524] sm:$0xf]
  %v362 = vld [vmem:[%s1 + $0x528] sm:$0xf]
  %v363 = vld [vmem:[%s1 + $0x52c] sm:$0xf]
  %v364 = vld [vmem:[%s1 + $0x530] sm:$0xf]
  %v365 = vld [vmem:[%s1 + $0x534] sm:$0xf]
  %v366 = vld [vmem:[%s1 + $0x538] sm:$0xf]
  %v367 = vld [vmem:[%s1 + $0x53c] sm:$0xf]
  %v368 = vld [vmem:[%s1 + $0x540] sm:$0xf]
  %v369 = vld [vmem:[%s1 + $0x544] sm:$0xf]
  %v370 = vld [vmem:[%s1 + $0x548] sm:$0xf]
  %v371 = vld [vmem:[%s1 + $0x54c] sm:$0xf]
  %v372 = vld [vmem:[%s1 + $0x550] sm:$0xf]
  %v373 = vld [vmem:[%s1 + $0x554] sm:$0xf]
  %v374 = vld [vmem:[%s1 + $0x558] sm:$0xf]
  %v375 = vld [vmem:[%s1 + $0x55c] sm:$0xf]
  %v376 = vld [vmem:[%s1 + $0x560] sm:$0xf]
  %v377 = vld [vmem:[%s1 + $0x564] sm:$0xf]
  %v378 = vld [vmem:[%s1 + $0x568] sm:$0xf]
  %v379 = vld [vmem:[%s1 + $0x56c] sm:$0xf]
  %v380 = vld [vmem:[%s1 + $0x570] sm:$0xf]
  %v381 = vld [vmem:[%s1 + $0x574] sm:$0xf]
  %v382 = vld [vmem:[%s1 + $0x578] sm:$0xf]
  %v383 = vld [vmem:[%s1 + $0x57c] sm:$0xf]
  %v384 = vld [vmem:[%s1 + $0x580] sm:$0xf]
  %v385 = vld [vmem:[%s1 + $0x584] sm:$0xf]
  %v386 = vld [vmem:[%s1 + $0x588] sm:$0xf]
  %v387 = vld [vmem:[%s1 + $0x58c] sm:$0xf]
  %v388 = vld [vmem:[%s1 + $0x590] sm:$0xf]
  %v389 = vld [vmem:[%s1 + $0x594] sm:$0xf]
  %v390 = vld [vmem:[%s1 + $0x598] sm:$0xf]
  %v391 = vld [vmem:[%s1 + $0x59c] sm:$0xf]
  %v392 = vld [vmem:[%s1 + $0x5a0] sm:$0xf]
  %v393 = vld [vmem:[%s1 + $0x5a4] sm:$0xf]
  %v394 = vld [vmem:[%s1 + $0x5a8] sm:$0xf]
  %v395 = vld [vmem:[%s1 + $0x5ac] sm:$0xf]
  %v396 = vld [vmem:[%s1 + $0x5b0] sm:$0xf]
  %v397 = vld [vmem:[%s1 + $0x5b4] sm:$0xf]
  %v398 = vld [vmem:[%s1 + $0x5b8] sm:$0xf]
  %v399 = vld [vmem:[%s1 + $0x5bc] sm:$0xf]
  %v400 = vld [vmem:[%s1 + $0x5c0] sm:$0xf]
  %v401 = vld [vmem:[%s1 + $0x5c4] sm:$0xf]
  %v402 = vld [vmem:[%s1 + $0x5c8] sm:$0xf]
  %v403 = vld [vmem:[%s1 + $0x5cc] sm:$0xf]
  %v404 = vld [vmem:[%s1 + $0x5d0] sm:$0xf]
  %v405 = vld [vmem:[%s1 + $0x5d4] sm:$0xf]
  %v406 = vld [vmem:[%s1 + $0x5d8] sm:$0xf]
  %v407 = vld [vmem:[%s1 + $0x5dc] sm:$0xf]
  %v408 = vld [vmem:[%s1 + $0x5e0] sm:$0xf]
  %v409 = vld [vmem:[%s1 + $0x5e4] sm:$0xf]
  %v410 = vld [vmem:[%s1 + $0x5e8] sm:$0xf]
  %v411 = vld [vmem:[%s1 + $0x5ec] sm:$0xf]
  %v412 = vld [vmem:[%s1 + $0x5f0] sm:$0xf]
  %v413 = vld [vmem:[%s1 + $0x5f4] sm:$0xf]
  %v414 = vld [vmem:[%s1 + $0x5f8] sm:$0xf]
  %v415 = vld [vmem:[%s1 + $0x5fc] sm:$0xf]
  %v416 = vld [vmem:[%s2] sm:$0x1]
  %v418 = vperm.slane %v416, 0
  %v432 = vunpack.c.l.b16 %v20
  %v433 = vunpack.c.h.b16 %v20
  %v434 = vunpack.c.l.b16 %v21
  %v435 = vunpack.c.h.b16 %v21
  %v436 = vunpack.c.l.b16 %v22
  %v437 = vunpack.c.h.b16 %v22
  %v438 = vunpack.c.l.b16 %v23
  %v439 = vunpack.c.h.b16 %v23
  %v440 = vunpack.c.l.b16 %v24
  %v441 = vunpack.c.h.b16 %v24
  %v442 = vunpack.c.l.b16 %v25
  %v443 = vunpack.c.h.b16 %v25
  %v444 = vunpack.c.l.b16 %v26
  %v445 = vunpack.c.h.b16 %v26
  %v446 = vunpack.c.l.b16 %v27
  %v447 = vunpack.c.h.b16 %v27
  %v448 = vunpack.c.l.b16 %v28
  %v449 = vunpack.c.h.b16 %v28
  %v450 = vunpack.c.l.b16 %v29
  %v451 = vunpack.c.h.b16 %v29
  %v452 = vunpack.c.l.b16 %v30
  %v453 = vunpack.c.h.b16 %v30
  %v454 = vunpack.c.l.b16 %v31
  %v455 = vunpack.c.h.b16 %v31
  %v456 = vpack.c.b16 %v432, %v432
  %v457 = vpack.c.b16 %v433, %v433
  %v458 = vpack.c.b16 %v434, %v434
  %v459 = vpack.c.b16 %v435, %v435
  %v460 = vpack.c.b16 %v436, %v436
  %v461 = vpack.c.b16 %v437, %v437
  %v462 = vpack.c.b16 %v438, %v438
  %v463 = vpack.c.b16 %v439, %v439
  %v464 = vpack.c.b16 %v440, %v440
  %v465 = vpack.c.b16 %v441, %v441
  %v466 = vpack.c.b16 %v442, %v442
  %v467 = vpack.c.b16 %v443, %v443
  %v468 = vpack.c.b16 %v444, %v444
  %v469 = vpack.c.b16 %v445, %v445
  %v470 = vpack.c.b16 %v446, %v446
  %v471 = vpack.c.b16 %v447, %v447
  %v472 = vpack.c.b16 %v448, %v448
  %v473 = vpack.c.b16 %v449, %v449
  %v474 = vpack.c.b16 %v450, %v450
  %v475 = vpack.c.b16 %v451, %v451
  %v476 = vpack.c.b16 %v452, %v452
  %v477 = vpack.c.b16 %v453, %v453
  %v478 = vpack.c.b16 %v454, %v454
  %v479 = vpack.c.b16 %v455, %v455
  %v888 = vunpack.c.l.b16 %v32
  %v889 = vunpack.c.l.b16 %v33
  %v890 = vunpack.c.l.b16 %v34
  %v891 = vunpack.c.l.b16 %v35
  %v892 = vunpack.c.l.b16 %v36
  %v893 = vunpack.c.l.b16 %v37
  %v894 = vunpack.c.l.b16 %v38
  %v895 = vunpack.c.l.b16 %v39
  %v896 = vunpack.c.l.b16 %v40
  %v897 = vunpack.c.l.b16 %v41
  %v898 = vunpack.c.l.b16 %v42
  %v899 = vunpack.c.l.b16 %v43
  %v900 = vunpack.c.l.b16 %v44
  %v901 = vunpack.c.l.b16 %v45
  %v902 = vunpack.c.l.b16 %v46
  %v903 = vunpack.c.l.b16 %v47
  %v904 = vunpack.c.l.b16 %v48
  %v905 = vunpack.c.l.b16 %v49
  %v906 = vunpack.c.l.b16 %v50
  %v907 = vunpack.c.l.b16 %v51
  %v908 = vunpack.c.l.b16 %v52
  %v909 = vunpack.c.l.b16 %v53
  %v910 = vunpack.c.l.b16 %v54
  %v911 = vunpack.c.l.b16 %v55
  %v912 = vunpack.c.l.b16 %v56
  %v913 = vunpack.c.l.b16 %v57
  %v914 = vunpack.c.l.b16 %v58
  %v915 = vunpack.c.l.b16 %v59
  %v916 = vunpack.c.l.b16 %v60
  %v917 = vunpack.c.l.b16 %v61
  %v918 = vunpack.c.l.b16 %v62
  %v919 = vunpack.c.l.b16 %v63
  %v920 = vunpack.c.l.b16 %v64
  %v921 = vunpack.c.l.b16 %v65
  %v922 = vunpack.c.l.b16 %v66
  %v923 = vunpack.c.l.b16 %v67
  %v924 = vunpack.c.l.b16 %v68
  %v925 = vunpack.c.l.b16 %v69
  %v926 = vunpack.c.l.b16 %v70
  %v927 = vunpack.c.l.b16 %v71
  %v928 = vunpack.c.l.b16 %v72
  %v929 = vunpack.c.l.b16 %v73
  %v930 = vunpack.c.l.b16 %v74
  %v931 = vunpack.c.l.b16 %v75
  %v932 = vunpack.c.l.b16 %v76
  %v933 = vunpack.c.l.b16 %v77
  %v934 = vunpack.c.l.b16 %v78
  %v935 = vunpack.c.l.b16 %v79
  %v936 = vunpack.c.l.b16 %v80
  %v937 = vunpack.c.l.b16 %v81
  %v938 = vunpack.c.l.b16 %v82
  %v939 = vunpack.c.l.b16 %v83
  %v940 = vunpack.c.l.b16 %v84
  %v941 = vunpack.c.l.b16 %v85
  %v942 = vunpack.c.l.b16 %v86
  %v943 = vunpack.c.l.b16 %v87
  %v944 = vunpack.c.l.b16 %v88
  %v945 = vunpack.c.l.b16 %v89
  %v946 = vunpack.c.l.b16 %v90
  %v947 = vunpack.c.l.b16 %v91
  %v948 = vunpack.c.l.b16 %v92
  %v949 = vunpack.c.l.b16 %v93
  %v950 = vunpack.c.l.b16 %v94
  %v951 = vunpack.c.l.b16 %v95
  %v952 = vunpack.c.l.b16 %v96
  %v953 = vunpack.c.l.b16 %v97
  %v954 = vunpack.c.l.b16 %v98
  %v955 = vunpack.c.l.b16 %v99
  %v956 = vunpack.c.l.b16 %v100
  %v957 = vunpack.c.l.b16 %v101
  %v958 = vunpack.c.l.b16 %v102
  %v959 = vunpack.c.l.b16 %v103
  %v960 = vunpack.c.l.b16 %v104
  %v961 = vunpack.c.l.b16 %v105
  %v962 = vunpack.c.l.b16 %v106
  %v963 = vunpack.c.l.b16 %v107
  %v964 = vunpack.c.l.b16 %v108
  %v965 = vunpack.c.l.b16 %v109
  %v966 = vunpack.c.l.b16 %v110
  %v967 = vunpack.c.l.b16 %v111
  %v968 = vunpack.c.l.b16 %v112
  %v969 = vunpack.c.l.b16 %v113
  %v970 = vunpack.c.l.b16 %v114
  %v971 = vunpack.c.l.b16 %v115
  %v972 = vunpack.c.l.b16 %v116
  %v973 = vunpack.c.l.b16 %v117
  %v974 = vunpack.c.l.b16 %v118
  %v975 = vunpack.c.l.b16 %v119
  %v976 = vunpack.c.l.b16 %v120
  %v977 = vunpack.c.l.b16 %v121
  %v978 = vunpack.c.l.b16 %v122
  %v979 = vunpack.c.l.b16 %v123
  %v980 = vunpack.c.l.b16 %v124
  %v981 = vunpack.c.l.b16 %v125
  %v982 = vunpack.c.l.b16 %v126
  %v983 = vunpack.c.l.b16 %v127
  %v984 = vunpack.c.l.b16 %v128
  %v985 = vunpack.c.l.b16 %v129
  %v986 = vunpack.c.l.b16 %v130
  %v987 = vunpack.c.l.b16 %v131
  %v988 = vunpack.c.l.b16 %v132
  %v989 = vunpack.c.l.b16 %v133
  %v990 = vunpack.c.l.b16 %v134
  %v991 = vunpack.c.l.b16 %v135
  %v992 = vunpack.c.l.b16 %v136
  %v993 = vunpack.c.l.b16 %v137
  %v994 = vunpack.c.l.b16 %v138
  %v995 = vunpack.c.l.b16 %v139
  %v996 = vunpack.c.l.b16 %v140
  %v997 = vunpack.c.l.b16 %v141
  %v998 = vunpack.c.l.b16 %v142
  %v999 = vunpack.c.l.b16 %v143
  %v1000 = vunpack.c.l.b16 %v144
  %v1001 = vunpack.c.l.b16 %v145
  %v1002 = vunpack.c.l.b16 %v146
  %v1003 = vunpack.c.l.b16 %v147
  %v1004 = vunpack.c.l.b16 %v148
  %v1005 = vunpack.c.l.b16 %v149
  %v1006 = vunpack.c.l.b16 %v150
  %v1007 = vunpack.c.l.b16 %v151
  %v1008 = vunpack.c.l.b16 %v152
  %v1009 = vunpack.c.l.b16 %v153
  %v1010 = vunpack.c.l.b16 %v154
  %v1011 = vunpack.c.l.b16 %v155
  %v1012 = vunpack.c.l.b16 %v156
  %v1013 = vunpack.c.l.b16 %v157
  %v1014 = vunpack.c.l.b16 %v158
  %v1015 = vunpack.c.l.b16 %v159
  %v1016 = vunpack.c.l.b16 %v160
  %v1017 = vunpack.c.l.b16 %v161
  %v1018 = vunpack.c.l.b16 %v162
  %v1019 = vunpack.c.l.b16 %v163
  %v1020 = vunpack.c.l.b16 %v164
  %v1021 = vunpack.c.l.b16 %v165
  %v1022 = vunpack.c.l.b16 %v166
  %v1023 = vunpack.c.l.b16 %v167
  %v1024 = vunpack.c.l.b16 %v168
  %v1025 = vunpack.c.l.b16 %v169
  %v1026 = vunpack.c.l.b16 %v170
  %v1027 = vunpack.c.l.b16 %v171
  %v1028 = vunpack.c.l.b16 %v172
  %v1029 = vunpack.c.l.b16 %v173
  %v1030 = vunpack.c.l.b16 %v174
  %v1031 = vunpack.c.l.b16 %v175
  %v1032 = vunpack.c.l.b16 %v176
  %v1033 = vunpack.c.l.b16 %v177
  %v1034 = vunpack.c.l.b16 %v178
  %v1035 = vunpack.c.l.b16 %v179
  %v1036 = vunpack.c.l.b16 %v180
  %v1037 = vunpack.c.l.b16 %v181
  %v1038 = vunpack.c.l.b16 %v182
  %v1039 = vunpack.c.l.b16 %v183
  %v1040 = vunpack.c.l.b16 %v184
  %v1041 = vunpack.c.l.b16 %v185
  %v1042 = vunpack.c.l.b16 %v186
  %v1043 = vunpack.c.l.b16 %v187
  %v1044 = vunpack.c.l.b16 %v188
  %v1045 = vunpack.c.l.b16 %v189
  %v1046 = vunpack.c.l.b16 %v190
  %v1047 = vunpack.c.l.b16 %v191
  %v1048 = vunpack.c.l.b16 %v192
  %v1049 = vunpack.c.l.b16 %v193
  %v1050 = vunpack.c.l.b16 %v194
  %v1051 = vunpack.c.l.b16 %v195
  %v1052 = vunpack.c.l.b16 %v196
  %v1053 = vunpack.c.l.b16 %v197
  %v1054 = vunpack.c.l.b16 %v198
  %v1055 = vunpack.c.l.b16 %v199
  %v1056 = vunpack.c.l.b16 %v200
  %v1057 = vunpack.c.l.b16 %v201
  %v1058 = vunpack.c.l.b16 %v202
  %v1059 = vunpack.c.l.b16 %v203
  %v1060 = vunpack.c.l.b16 %v204
  %v1061 = vunpack.c.l.b16 %v205
  %v1062 = vunpack.c.l.b16 %v206
  %v1063 = vunpack.c.l.b16 %v207
  %v1064 = vunpack.c.l.b16 %v208
  %v1065 = vunpack.c.l.b16 %v209
  %v1066 = vunpack.c.l.b16 %v210
  %v1067 = vunpack.c.l.b16 %v211
  %v1068 = vunpack.c.l.b16 %v212
  %v1069 = vunpack.c.l.b16 %v213
  %v1070 = vunpack.c.l.b16 %v214
  %v1071 = vunpack.c.l.b16 %v215
  %v1072 = vunpack.c.l.b16 %v216
  %v1073 = vunpack.c.l.b16 %v217
  %v1074 = vunpack.c.l.b16 %v218
  %v1075 = vunpack.c.l.b16 %v219
  %v1076 = vunpack.c.l.b16 %v220
  %v1077 = vunpack.c.l.b16 %v221
  %v1078 = vunpack.c.l.b16 %v222
  %v1079 = vunpack.c.l.b16 %v223
  %v1080 = vunpack.c.l.b16 %v224
  %v1081 = vunpack.c.l.b16 %v225
  %v1082 = vunpack.c.l.b16 %v226
  %v1083 = vunpack.c.l.b16 %v227
  %v1084 = vunpack.c.l.b16 %v228
  %v1085 = vunpack.c.l.b16 %v229
  %v1086 = vunpack.c.l.b16 %v230
  %v1087 = vunpack.c.l.b16 %v231
  %v1088 = vunpack.c.l.b16 %v232
  %v1089 = vunpack.c.l.b16 %v233
  %v1090 = vunpack.c.l.b16 %v234
  %v1091 = vunpack.c.l.b16 %v235
  %v1092 = vunpack.c.l.b16 %v236
  %v1093 = vunpack.c.l.b16 %v237
  %v1094 = vunpack.c.l.b16 %v238
  %v1095 = vunpack.c.l.b16 %v239
  %v1096 = vunpack.c.l.b16 %v240
  %v1097 = vunpack.c.l.b16 %v241
  %v1098 = vunpack.c.l.b16 %v242
  %v1099 = vunpack.c.l.b16 %v243
  %v1100 = vunpack.c.l.b16 %v244
  %v1101 = vunpack.c.l.b16 %v245
  %v1102 = vunpack.c.l.b16 %v246
  %v1103 = vunpack.c.l.b16 %v247
  %v1104 = vunpack.c.l.b16 %v248
  %v1105 = vunpack.c.l.b16 %v249
  %v1106 = vunpack.c.l.b16 %v250
  %v1107 = vunpack.c.l.b16 %v251
  %v1108 = vunpack.c.l.b16 %v252
  %v1109 = vunpack.c.l.b16 %v253
  %v1110 = vunpack.c.l.b16 %v254
  %v1111 = vunpack.c.l.b16 %v255
  %v1112 = vunpack.c.l.b16 %v256
  %v1113 = vunpack.c.l.b16 %v257
  %v1114 = vunpack.c.l.b16 %v258
  %v1115 = vunpack.c.l.b16 %v259
  %v1116 = vunpack.c.l.b16 %v260
  %v1117 = vunpack.c.l.b16 %v261
  %v1118 = vunpack.c.l.b16 %v262
  %v1119 = vunpack.c.l.b16 %v263
  %v1120 = vunpack.c.l.b16 %v264
  %v1121 = vunpack.c.l.b16 %v265
  %v1122 = vunpack.c.l.b16 %v266
  %v1123 = vunpack.c.l.b16 %v267
  %v1124 = vunpack.c.l.b16 %v268
  %v1125 = vunpack.c.l.b16 %v269
  %v1126 = vunpack.c.l.b16 %v270
  %v1127 = vunpack.c.l.b16 %v271
  %v1128 = vunpack.c.l.b16 %v272
  %v1129 = vunpack.c.l.b16 %v273
  %v1130 = vunpack.c.l.b16 %v274
  %v1131 = vunpack.c.l.b16 %v275
  %v1132 = vunpack.c.l.b16 %v276
  %v1133 = vunpack.c.l.b16 %v277
  %v1134 = vunpack.c.l.b16 %v278
  %v1135 = vunpack.c.l.b16 %v279
  %v1136 = vunpack.c.l.b16 %v280
  %v1137 = vunpack.c.l.b16 %v281
  %v1138 = vunpack.c.l.b16 %v282
  %v1139 = vunpack.c.l.b16 %v283
  %v1140 = vunpack.c.l.b16 %v284
  %v1141 = vunpack.c.l.b16 %v285
  %v1142 = vunpack.c.l.b16 %v286
  %v1143 = vunpack.c.l.b16 %v287
  %v1144 = vunpack.c.l.b16 %v288
  %v1145 = vunpack.c.l.b16 %v289
  %v1146 = vunpack.c.l.b16 %v290
  %v1147 = vunpack.c.l.b16 %v291
  %v1148 = vunpack.c.l.b16 %v292
  %v1149 = vunpack.c.l.b16 %v293
  %v1150 = vunpack.c.l.b16 %v294
  %v1151 = vunpack.c.l.b16 %v295
  %v1152 = vunpack.c.l.b16 %v296
  %v1153 = vunpack.c.l.b16 %v297
  %v1154 = vunpack.c.l.b16 %v298
  %v1155 = vunpack.c.l.b16 %v299
  %v1156 = vunpack.c.l.b16 %v300
  %v1157 = vunpack.c.l.b16 %v301
  %v1158 = vunpack.c.l.b16 %v302
  %v1159 = vunpack.c.l.b16 %v303
  %v1160 = vunpack.c.l.b16 %v304
  %v1161 = vunpack.c.l.b16 %v305
  %v1162 = vunpack.c.l.b16 %v306
  %v1163 = vunpack.c.l.b16 %v307
  %v1164 = vunpack.c.l.b16 %v308
  %v1165 = vunpack.c.l.b16 %v309
  %v1166 = vunpack.c.l.b16 %v310
  %v1167 = vunpack.c.l.b16 %v311
  %v1168 = vunpack.c.l.b16 %v312
  %v1169 = vunpack.c.l.b16 %v313
  %v1170 = vunpack.c.l.b16 %v314
  %v1171 = vunpack.c.l.b16 %v315
  %v1172 = vunpack.c.l.b16 %v316
  %v1173 = vunpack.c.l.b16 %v317
  %v1174 = vunpack.c.l.b16 %v318
  %v1175 = vunpack.c.l.b16 %v319
  %v1176 = vunpack.c.l.b16 %v320
  %v1177 = vunpack.c.l.b16 %v321
  %v1178 = vunpack.c.l.b16 %v322
  %v1179 = vunpack.c.l.b16 %v323
  %v1180 = vunpack.c.l.b16 %v324
  %v1181 = vunpack.c.l.b16 %v325
  %v1182 = vunpack.c.l.b16 %v326
  %v1183 = vunpack.c.l.b16 %v327
  %v1184 = vunpack.c.l.b16 %v328
  %v1185 = vunpack.c.l.b16 %v329
  %v1186 = vunpack.c.l.b16 %v330
  %v1187 = vunpack.c.l.b16 %v331
  %v1188 = vunpack.c.l.b16 %v332
  %v1189 = vunpack.c.l.b16 %v333
  %v1190 = vunpack.c.l.b16 %v334
  %v1191 = vunpack.c.l.b16 %v335
  %v1192 = vunpack.c.l.b16 %v336
  %v1193 = vunpack.c.l.b16 %v337
  %v1194 = vunpack.c.l.b16 %v338
  %v1195 = vunpack.c.l.b16 %v339
  %v1196 = vunpack.c.l.b16 %v340
  %v1197 = vunpack.c.l.b16 %v341
  %v1198 = vunpack.c.l.b16 %v342
  %v1199 = vunpack.c.l.b16 %v343
  %v1200 = vunpack.c.l.b16 %v344
  %v1201 = vunpack.c.l.b16 %v345
  %v1202 = vunpack.c.l.b16 %v346
  %v1203 = vunpack.c.l.b16 %v347
  %v1204 = vunpack.c.l.b16 %v348
  %v1205 = vunpack.c.l.b16 %v349
  %v1206 = vunpack.c.l.b16 %v350
  %v1207 = vunpack.c.l.b16 %v351
  %v1208 = vunpack.c.l.b16 %v352
  %v1209 = vunpack.c.l.b16 %v353
  %v1210 = vunpack.c.l.b16 %v354
  %v1211 = vunpack.c.l.b16 %v355
  %v1212 = vunpack.c.l.b16 %v356
  %v1213 = vunpack.c.l.b16 %v357
  %v1214 = vunpack.c.l.b16 %v358
  %v1215 = vunpack.c.l.b16 %v359
  %v1216 = vunpack.c.l.b16 %v360
  %v1217 = vunpack.c.l.b16 %v361
  %v1218 = vunpack.c.l.b16 %v362
  %v1219 = vunpack.c.l.b16 %v363
  %v1220 = vunpack.c.l.b16 %v364
  %v1221 = vunpack.c.l.b16 %v365
  %v1222 = vunpack.c.l.b16 %v366
  %v1223 = vunpack.c.l.b16 %v367
  %v1224 = vunpack.c.l.b16 %v368
  %v1225 = vunpack.c.l.b16 %v369
  %v1226 = vunpack.c.l.b16 %v370
  %v1227 = vunpack.c.l.b16 %v371
  %v1228 = vunpack.c.l.b16 %v372
  %v1229 = vunpack.c.l.b16 %v373
  %v1230 = vunpack.c.l.b16 %v374
  %v1231 = vunpack.c.l.b16 %v375
  %v1232 = vunpack.c.l.b16 %v376
  %v1233 = vunpack.c.l.b16 %v377
  %v1234 = vunpack.c.l.b16 %v378
  %v1235 = vunpack.c.l.b16 %v379
  %v1236 = vunpack.c.l.b16 %v380
  %v1237 = vunpack.c.l.b16 %v381
  %v1238 = vunpack.c.l.b16 %v382
  %v1239 = vunpack.c.l.b16 %v383
  %v1240 = vunpack.c.l.b16 %v384
  %v1241 = vunpack.c.l.b16 %v385
  %v1242 = vunpack.c.l.b16 %v386
  %v1243 = vunpack.c.l.b16 %v387
  %v1244 = vunpack.c.l.b16 %v388
  %v1245 = vunpack.c.l.b16 %v389
  %v1246 = vunpack.c.l.b16 %v390
  %v1247 = vunpack.c.l.b16 %v391
  %v1248 = vunpack.c.l.b16 %v392
  %v1249 = vunpack.c.l.b16 %v393
  %v1250 = vunpack.c.l.b16 %v394
  %v1251 = vunpack.c.l.b16 %v395
  %v1252 = vunpack.c.l.b16 %v396
  %v1253 = vunpack.c.l.b16 %v397
  %v1254 = vunpack.c.l.b16 %v398
  %v1255 = vunpack.c.l.b16 %v399
  %v1256 = vunpack.c.l.b16 %v400
  %v1257 = vunpack.c.l.b16 %v401
  %v1258 = vunpack.c.l.b16 %v402
  %v1259 = vunpack.c.l.b16 %v403
  %v1260 = vunpack.c.l.b16 %v404
  %v1261 = vunpack.c.l.b16 %v405
  %v1262 = vunpack.c.l.b16 %v406
  %v1263 = vunpack.c.l.b16 %v407
  %v1264 = vunpack.c.l.b16 %v408
  %v1265 = vunpack.c.l.b16 %v409
  %v1266 = vunpack.c.l.b16 %v410
  %v1267 = vunpack.c.l.b16 %v411
  %v1268 = vunpack.c.l.b16 %v412
  %v1269 = vunpack.c.l.b16 %v413
  %v1270 = vunpack.c.l.b16 %v414
  %v1271 = vunpack.c.l.b16 %v415
  %v1272 = vpack.c.b16 %v889, %v888
  %v1273 = vpack.c.b16 %v891, %v890
  %v1274 = vpack.c.b16 %v893, %v892
  %v1275 = vpack.c.b16 %v895, %v894
  %v1276 = vpack.c.b16 %v897, %v896
  %v1277 = vpack.c.b16 %v899, %v898
  %v1278 = vpack.c.b16 %v901, %v900
  %v1279 = vpack.c.b16 %v903, %v902
  %v1280 = vpack.c.b16 %v905, %v904
  %v1281 = vpack.c.b16 %v907, %v906
  %v1282 = vpack.c.b16 %v909, %v908
  %v1283 = vpack.c.b16 %v911, %v910
  %v1284 = vpack.c.b16 %v913, %v912
  %v1285 = vpack.c.b16 %v915, %v914
  %v1286 = vpack.c.b16 %v917, %v916
  %v1287 = vpack.c.b16 %v919, %v918
  %v1288 = vpack.c.b16 %v921, %v920
  %v1289 = vpack.c.b16 %v923, %v922
  %v1290 = vpack.c.b16 %v925, %v924
  %v1291 = vpack.c.b16 %v927, %v926
  %v1292 = vpack.c.b16 %v929, %v928
  %v1293 = vpack.c.b16 %v931, %v930
  %v1294 = vpack.c.b16 %v933, %v932
  %v1295 = vpack.c.b16 %v935, %v934
  %v1296 = vpack.c.b16 %v937, %v936
  %v1297 = vpack.c.b16 %v939, %v938
  %v1298 = vpack.c.b16 %v941, %v940
  %v1299 = vpack.c.b16 %v943, %v942
  %v1300 = vpack.c.b16 %v945, %v944
  %v1301 = vpack.c.b16 %v947, %v946
  %v1302 = vpack.c.b16 %v949, %v948
  %v1303 = vpack.c.b16 %v951, %v950
  %v1304 = vpack.c.b16 %v953, %v952
  %v1305 = vpack.c.b16 %v955, %v954
  %v1306 = vpack.c.b16 %v957, %v956
  %v1307 = vpack.c.b16 %v959, %v958
  %v1308 = vpack.c.b16 %v961, %v960
  %v1309 = vpack.c.b16 %v963, %v962
  %v1310 = vpack.c.b16 %v965, %v964
  %v1311 = vpack.c.b16 %v967, %v966
  %v1312 = vpack.c.b16 %v969, %v968
  %v1313 = vpack.c.b16 %v971, %v970
  %v1314 = vpack.c.b16 %v973, %v972
  %v1315 = vpack.c.b16 %v975, %v974
  %v1316 = vpack.c.b16 %v977, %v976
  %v1317 = vpack.c.b16 %v979, %v978
  %v1318 = vpack.c.b16 %v981, %v980
  %v1319 = vpack.c.b16 %v983, %v982
  %v1320 = vpack.c.b16 %v985, %v984
  %v1321 = vpack.c.b16 %v987, %v986
  %v1322 = vpack.c.b16 %v989, %v988
  %v1323 = vpack.c.b16 %v991, %v990
  %v1324 = vpack.c.b16 %v993, %v992
  %v1325 = vpack.c.b16 %v995, %v994
  %v1326 = vpack.c.b16 %v997, %v996
  %v1327 = vpack.c.b16 %v999, %v998
  %v1328 = vpack.c.b16 %v1001, %v1000
  %v1329 = vpack.c.b16 %v1003, %v1002
  %v1330 = vpack.c.b16 %v1005, %v1004
  %v1331 = vpack.c.b16 %v1007, %v1006
  %v1332 = vpack.c.b16 %v1009, %v1008
  %v1333 = vpack.c.b16 %v1011, %v1010
  %v1334 = vpack.c.b16 %v1013, %v1012
  %v1335 = vpack.c.b16 %v1015, %v1014
  %v1336 = vpack.c.b16 %v1017, %v1016
  %v1337 = vpack.c.b16 %v1019, %v1018
  %v1338 = vpack.c.b16 %v1021, %v1020
  %v1339 = vpack.c.b16 %v1023, %v1022
  %v1340 = vpack.c.b16 %v1025, %v1024
  %v1341 = vpack.c.b16 %v1027, %v1026
  %v1342 = vpack.c.b16 %v1029, %v1028
  %v1343 = vpack.c.b16 %v1031, %v1030
  %v1344 = vpack.c.b16 %v1033, %v1032
  %v1345 = vpack.c.b16 %v1035, %v1034
  %v1346 = vpack.c.b16 %v1037, %v1036
  %v1347 = vpack.c.b16 %v1039, %v1038
  %v1348 = vpack.c.b16 %v1041, %v1040
  %v1349 = vpack.c.b16 %v1043, %v1042
  %v1350 = vpack.c.b16 %v1045, %v1044
  %v1351 = vpack.c.b16 %v1047, %v1046
  %v1352 = vpack.c.b16 %v1049, %v1048
  %v1353 = vpack.c.b16 %v1051, %v1050
  %v1354 = vpack.c.b16 %v1053, %v1052
  %v1355 = vpack.c.b16 %v1055, %v1054
  %v1356 = vpack.c.b16 %v1057, %v1056
  %v1357 = vpack.c.b16 %v1059, %v1058
  %v1358 = vpack.c.b16 %v1061, %v1060
  %v1359 = vpack.c.b16 %v1063, %v1062
  %v1360 = vpack.c.b16 %v1065, %v1064
  %v1361 = vpack.c.b16 %v1067, %v1066
  %v1362 = vpack.c.b16 %v1069, %v1068
  %v1363 = vpack.c.b16 %v1071, %v1070
  %v1364 = vpack.c.b16 %v1073, %v1072
  %v1365 = vpack.c.b16 %v1075, %v1074
  %v1366 = vpack.c.b16 %v1077, %v1076
  %v1367 = vpack.c.b16 %v1079, %v1078
  %v1368 = vpack.c.b16 %v1081, %v1080
  %v1369 = vpack.c.b16 %v1083, %v1082
  %v1370 = vpack.c.b16 %v1085, %v1084
  %v1371 = vpack.c.b16 %v1087, %v1086
  %v1372 = vpack.c.b16 %v1089, %v1088
  %v1373 = vpack.c.b16 %v1091, %v1090
  %v1374 = vpack.c.b16 %v1093, %v1092
  %v1375 = vpack.c.b16 %v1095, %v1094
  %v1376 = vpack.c.b16 %v1097, %v1096
  %v1377 = vpack.c.b16 %v1099, %v1098
  %v1378 = vpack.c.b16 %v1101, %v1100
  %v1379 = vpack.c.b16 %v1103, %v1102
  %v1380 = vpack.c.b16 %v1105, %v1104
  %v1381 = vpack.c.b16 %v1107, %v1106
  %v1382 = vpack.c.b16 %v1109, %v1108
  %v1383 = vpack.c.b16 %v1111, %v1110
  %v1384 = vpack.c.b16 %v1113, %v1112
  %v1385 = vpack.c.b16 %v1115, %v1114
  %v1386 = vpack.c.b16 %v1117, %v1116
  %v1387 = vpack.c.b16 %v1119, %v1118
  %v1388 = vpack.c.b16 %v1121, %v1120
  %v1389 = vpack.c.b16 %v1123, %v1122
  %v1390 = vpack.c.b16 %v1125, %v1124
  %v1391 = vpack.c.b16 %v1127, %v1126
  %v1392 = vpack.c.b16 %v1129, %v1128
  %v1393 = vpack.c.b16 %v1131, %v1130
  %v1394 = vpack.c.b16 %v1133, %v1132
  %v1395 = vpack.c.b16 %v1135, %v1134
  %v1396 = vpack.c.b16 %v1137, %v1136
  %v1397 = vpack.c.b16 %v1139, %v1138
  %v1398 = vpack.c.b16 %v1141, %v1140
  %v1399 = vpack.c.b16 %v1143, %v1142
  %v1400 = vpack.c.b16 %v1145, %v1144
  %v1401 = vpack.c.b16 %v1147, %v1146
  %v1402 = vpack.c.b16 %v1149, %v1148
  %v1403 = vpack.c.b16 %v1151, %v1150
  %v1404 = vpack.c.b16 %v1153, %v1152
  %v1405 = vpack.c.b16 %v1155, %v1154
  %v1406 = vpack.c.b16 %v1157, %v1156
  %v1407 = vpack.c.b16 %v1159, %v1158
  %v1408 = vpack.c.b16 %v1161, %v1160
  %v1409 = vpack.c.b16 %v1163, %v1162
  %v1410 = vpack.c.b16 %v1165, %v1164
  %v1411 = vpack.c.b16 %v1167, %v1166
  %v1412 = vpack.c.b16 %v1169, %v1168
  %v1413 = vpack.c.b16 %v1171, %v1170
  %v1414 = vpack.c.b16 %v1173, %v1172
  %v1415 = vpack.c.b16 %v1175, %v1174
  %v1416 = vpack.c.b16 %v1177, %v1176
  %v1417 = vpack.c.b16 %v1179, %v1178
  %v1418 = vpack.c.b16 %v1181, %v1180
  %v1419 = vpack.c.b16 %v1183, %v1182
  %v1420 = vpack.c.b16 %v1185, %v1184
  %v1421 = vpack.c.b16 %v1187, %v1186
  %v1422 = vpack.c.b16 %v1189, %v1188
  %v1423 = vpack.c.b16 %v1191, %v1190
  %v1424 = vpack.c.b16 %v1193, %v1192
  %v1425 = vpack.c.b16 %v1195, %v1194
  %v1426 = vpack.c.b16 %v1197, %v1196
  %v1427 = vpack.c.b16 %v1199, %v1198
  %v1428 = vpack.c.b16 %v1201, %v1200
  %v1429 = vpack.c.b16 %v1203, %v1202
  %v1430 = vpack.c.b16 %v1205, %v1204
  %v1431 = vpack.c.b16 %v1207, %v1206
  %v1432 = vpack.c.b16 %v1209, %v1208
  %v1433 = vpack.c.b16 %v1211, %v1210
  %v1434 = vpack.c.b16 %v1213, %v1212
  %v1435 = vpack.c.b16 %v1215, %v1214
  %v1436 = vpack.c.b16 %v1217, %v1216
  %v1437 = vpack.c.b16 %v1219, %v1218
  %v1438 = vpack.c.b16 %v1221, %v1220
  %v1439 = vpack.c.b16 %v1223, %v1222
  %v1440 = vpack.c.b16 %v1225, %v1224
  %v1441 = vpack.c.b16 %v1227, %v1226
  %v1442 = vpack.c.b16 %v1229, %v1228
  %v1443 = vpack.c.b16 %v1231, %v1230
  %v1444 = vpack.c.b16 %v1233, %v1232
  %v1445 = vpack.c.b16 %v1235, %v1234
  %v1446 = vpack.c.b16 %v1237, %v1236
  %v1447 = vpack.c.b16 %v1239, %v1238
  %v1448 = vpack.c.b16 %v1241, %v1240
  %v1449 = vpack.c.b16 %v1243, %v1242
  %v1450 = vpack.c.b16 %v1245, %v1244
  %v1451 = vpack.c.b16 %v1247, %v1246
  %v1452 = vpack.c.b16 %v1249, %v1248
  %v1453 = vpack.c.b16 %v1251, %v1250
  %v1454 = vpack.c.b16 %v1253, %v1252
  %v1455 = vpack.c.b16 %v1255, %v1254
  %v1456 = vpack.c.b16 %v1257, %v1256
  %v1457 = vpack.c.b16 %v1259, %v1258
  %v1458 = vpack.c.b16 %v1261, %v1260
  %v1459 = vpack.c.b16 %v1263, %v1262
  %v1460 = vpack.c.b16 %v1265, %v1264
  %v1461 = vpack.c.b16 %v1267, %v1266
  %v1462 = vpack.c.b16 %v1269, %v1268
  %v1463 = vpack.c.b16 %v1271, %v1270
  %1656 = vmatpush.bf16.msra.mxu0 %v1279
  %1657 = vmatpush.bf16.msra.mxu0 %v1278
  %1658 = vmatpush.bf16.msra.mxu0 %v1277
  %1659 = vmatpush.bf16.msra.mxu0 %v1276
  %1660 = vmatpush.bf16.msra.mxu0 %v1275
  %1661 = vmatpush.bf16.msra.mxu0 %v1274
  %1662 = vmatpush.bf16.msra.mxu0 %v1273
  %1663 = vmatpush.bf16.msra.mxu0 %v1272
  %1664 = vmatmul.bf16.gmra.mxu0 %v456
  %v1665 = vpop.f32.mrf.mxu0
  %v1666 = vadd.f32 %v418, %v1665
  %v1667 = vpop.f32.mrf.mxu0
  %1668 = vdwg.mxu0
  %1669 = vmatpush.bf16.msra.mxu0 %v1287
  %1670 = vmatpush.bf16.msra.mxu0 %v1286
  %1671 = vmatpush.bf16.msra.mxu0 %v1285
  %1672 = vmatpush.bf16.msra.mxu0 %v1284
  %1673 = vmatpush.bf16.msra.mxu0 %v1283
  %1674 = vmatpush.bf16.msra.mxu0 %v1282
  %1675 = vmatpush.bf16.msra.mxu0 %v1281
  %1676 = vmatpush.bf16.msra.mxu0 %v1280
  %1677 = vmatmul.bf16.gmra.mxu0 %v457
  %v1678 = vpop.f32.mrf.mxu0
  %v1679 = vadd.f32 %v1666, %v1678
  %v1680 = vpop.f32.mrf.mxu0
  %1681 = vdwg.mxu0
  %1682 = vmatpush.bf16.msra.mxu0 %v1295
  %1683 = vmatpush.bf16.msra.mxu0 %v1294
  %1684 = vmatpush.bf16.msra.mxu0 %v1293
  %1685 = vmatpush.bf16.msra.mxu0 %v1292
  %1686 = vmatpush.bf16.msra.mxu0 %v1291
  %1687 = vmatpush.bf16.msra.mxu0 %v1290
  %1688 = vmatpush.bf16.msra.mxu0 %v1289
  %1689 = vmatpush.bf16.msra.mxu0 %v1288
  %1690 = vmatmul.bf16.gmra.mxu0 %v458
  %v1691 = vpop.f32.mrf.mxu0
  %v1692 = vadd.f32 %v1679, %v1691
  %v1693 = vpop.f32.mrf.mxu0
  %1694 = vdwg.mxu0
  %1695 = vmatpush.bf16.msra.mxu0 %v1303
  %1696 = vmatpush.bf16.msra.mxu0 %v1302
  %1697 = vmatpush.bf16.msra.mxu0 %v1301
  %1698 = vmatpush.bf16.msra.mxu0 %v1300
  %1699 = vmatpush.bf16.msra.mxu0 %v1299
  %1700 = vmatpush.bf16.msra.mxu0 %v1298
  %1701 = vmatpush.bf16.msra.mxu0 %v1297
  %1702 = vmatpush.bf16.msra.mxu0 %v1296
  %1703 = vmatmul.bf16.gmra.mxu0 %v459
  %v1704 = vpop.f32.mrf.mxu0
  %v1705 = vadd.f32 %v1692, %v1704
  %v1706 = vpop.f32.mrf.mxu0
  %1707 = vdwg.mxu0
  %1708 = vmatpush.bf16.msra.mxu0 %v1311
  %1709 = vmatpush.bf16.msra.mxu0 %v1310
  %1710 = vmatpush.bf16.msra.mxu0 %v1309
  %1711 = vmatpush.bf16.msra.mxu0 %v1308
  %1712 = vmatpush.bf16.msra.mxu0 %v1307
  %1713 = vmatpush.bf16.msra.mxu0 %v1306
  %1714 = vmatpush.bf16.msra.mxu0 %v1305
  %1715 = vmatpush.bf16.msra.mxu0 %v1304
  %1716 = vmatmul.bf16.gmra.mxu0 %v460
  %v1717 = vpop.f32.mrf.mxu0
  %v1718 = vadd.f32 %v1705, %v1717
  %v1719 = vpop.f32.mrf.mxu0
  %1720 = vdwg.mxu0
  %1721 = vmatpush.bf16.msra.mxu0 %v1319
  %1722 = vmatpush.bf16.msra.mxu0 %v1318
  %1723 = vmatpush.bf16.msra.mxu0 %v1317
  %1724 = vmatpush.bf16.msra.mxu0 %v1316
  %1725 = vmatpush.bf16.msra.mxu0 %v1315
  %1726 = vmatpush.bf16.msra.mxu0 %v1314
  %1727 = vmatpush.bf16.msra.mxu0 %v1313
  %1728 = vmatpush.bf16.msra.mxu0 %v1312
  %1729 = vmatmul.bf16.gmra.mxu0 %v461
  %v1730 = vpop.f32.mrf.mxu0
  %v1731 = vadd.f32 %v1718, %v1730
  %v1732 = vpop.f32.mrf.mxu0
  %1733 = vdwg.mxu0
  %1734 = vmatpush.bf16.msra.mxu0 %v1327
  %1735 = vmatpush.bf16.msra.mxu0 %v1326
  %1736 = vmatpush.bf16.msra.mxu0 %v1325
  %1737 = vmatpush.bf16.msra.mxu0 %v1324
  %1738 = vmatpush.bf16.msra.mxu0 %v1323
  %1739 = vmatpush.bf16.msra.mxu0 %v1322
  %1740 = vmatpush.bf16.msra.mxu0 %v1321
  %1741 = vmatpush.bf16.msra.mxu0 %v1320
  %1742 = vmatmul.bf16.gmra.mxu0 %v462
  %v1743 = vpop.f32.mrf.mxu0
  %v1744 = vadd.f32 %v1731, %v1743
  %v1745 = vpop.f32.mrf.mxu0
  %1746 = vdwg.mxu0
  %1747 = vmatpush.bf16.msra.mxu0 %v1335
  %1748 = vmatpush.bf16.msra.mxu0 %v1334
  %1749 = vmatpush.bf16.msra.mxu0 %v1333
  %1750 = vmatpush.bf16.msra.mxu0 %v1332
  %1751 = vmatpush.bf16.msra.mxu0 %v1331
  %1752 = vmatpush.bf16.msra.mxu0 %v1330
  %1753 = vmatpush.bf16.msra.mxu0 %v1329
  %1754 = vmatpush.bf16.msra.mxu0 %v1328
  %1755 = vmatmul.bf16.gmra.mxu0 %v463
  %v1756 = vpop.f32.mrf.mxu0
  %v1757 = vadd.f32 %v1744, %v1756
  %v1758 = vpop.f32.mrf.mxu0
  %1759 = vdwg.mxu0
  %1760 = vmatpush.bf16.msra.mxu0 %v1343
  %1761 = vmatpush.bf16.msra.mxu0 %v1342
  %1762 = vmatpush.bf16.msra.mxu0 %v1341
  %1763 = vmatpush.bf16.msra.mxu0 %v1340
  %1764 = vmatpush.bf16.msra.mxu0 %v1339
  %1765 = vmatpush.bf16.msra.mxu0 %v1338
  %1766 = vmatpush.bf16.msra.mxu0 %v1337
  %1767 = vmatpush.bf16.msra.mxu0 %v1336
  %1768 = vmatmul.bf16.gmra.mxu0 %v464
  %v1769 = vpop.f32.mrf.mxu0
  %v1770 = vadd.f32 %v1757, %v1769
  %v1771 = vpop.f32.mrf.mxu0
  %1772 = vdwg.mxu0
  %1773 = vmatpush.bf16.msra.mxu0 %v1351
  %1774 = vmatpush.bf16.msra.mxu0 %v1350
  %1775 = vmatpush.bf16.msra.mxu0 %v1349
  %1776 = vmatpush.bf16.msra.mxu0 %v1348
  %1777 = vmatpush.bf16.msra.mxu0 %v1347
  %1778 = vmatpush.bf16.msra.mxu0 %v1346
  %1779 = vmatpush.bf16.msra.mxu0 %v1345
  %1780 = vmatpush.bf16.msra.mxu0 %v1344
  %1781 = vmatmul.bf16.gmra.mxu0 %v465
  %v1782 = vpop.f32.mrf.mxu0
  %v1783 = vadd.f32 %v1770, %v1782
  %v1784 = vpop.f32.mrf.mxu0
  %1785 = vdwg.mxu0
  %1786 = vmatpush.bf16.msra.mxu0 %v1359
  %1787 = vmatpush.bf16.msra.mxu0 %v1358
  %1788 = vmatpush.bf16.msra.mxu0 %v1357
  %1789 = vmatpush.bf16.msra.mxu0 %v1356
  %1790 = vmatpush.bf16.msra.mxu0 %v1355
  %1791 = vmatpush.bf16.msra.mxu0 %v1354
  %1792 = vmatpush.bf16.msra.mxu0 %v1353
  %1793 = vmatpush.bf16.msra.mxu0 %v1352
  %1794 = vmatmul.bf16.gmra.mxu0 %v466
  %v1795 = vpop.f32.mrf.mxu0
  %v1796 = vadd.f32 %v1783, %v1795
  %v1797 = vpop.f32.mrf.mxu0
  %1798 = vdwg.mxu0
  %1799 = vmatpush.bf16.msra.mxu0 %v1367
  %1800 = vmatpush.bf16.msra.mxu0 %v1366
  %1801 = vmatpush.bf16.msra.mxu0 %v1365
  %1802 = vmatpush.bf16.msra.mxu0 %v1364
  %1803 = vmatpush.bf16.msra.mxu0 %v1363
  %1804 = vmatpush.bf16.msra.mxu0 %v1362
  %1805 = vmatpush.bf16.msra.mxu0 %v1361
  %1806 = vmatpush.bf16.msra.mxu0 %v1360
  %1807 = vmatmul.bf16.gmra.mxu0 %v467
  %v1808 = vpop.f32.mrf.mxu0
  %v1809 = vadd.f32 %v1796, %v1808
  %v1810 = vpop.f32.mrf.mxu0
  %1811 = vdwg.mxu0
  %1812 = vmatpush.bf16.msra.mxu0 %v1375
  %1813 = vmatpush.bf16.msra.mxu0 %v1374
  %1814 = vmatpush.bf16.msra.mxu0 %v1373
  %1815 = vmatpush.bf16.msra.mxu0 %v1372
  %1816 = vmatpush.bf16.msra.mxu0 %v1371
  %1817 = vmatpush.bf16.msra.mxu0 %v1370
  %1818 = vmatpush.bf16.msra.mxu0 %v1369
  %1819 = vmatpush.bf16.msra.mxu0 %v1368
  %1820 = vmatmul.bf16.gmra.mxu0 %v468
  %v1821 = vpop.f32.mrf.mxu0
  %v1822 = vadd.f32 %v1809, %v1821
  %v1823 = vpop.f32.mrf.mxu0
  %1824 = vdwg.mxu0
  %1825 = vmatpush.bf16.msra.mxu0 %v1383
  %1826 = vmatpush.bf16.msra.mxu0 %v1382
  %1827 = vmatpush.bf16.msra.mxu0 %v1381
  %1828 = vmatpush.bf16.msra.mxu0 %v1380
  %1829 = vmatpush.bf16.msra.mxu0 %v1379
  %1830 = vmatpush.bf16.msra.mxu0 %v1378
  %1831 = vmatpush.bf16.msra.mxu0 %v1377
  %1832 = vmatpush.bf16.msra.mxu0 %v1376
  %1833 = vmatmul.bf16.gmra.mxu0 %v469
  %v1834 = vpop.f32.mrf.mxu0
  %v1835 = vadd.f32 %v1822, %v1834
  %v1836 = vpop.f32.mrf.mxu0
  %1837 = vdwg.mxu0
  %1838 = vmatpush.bf16.msra.mxu0 %v1391
  %1839 = vmatpush.bf16.msra.mxu0 %v1390
  %1840 = vmatpush.bf16.msra.mxu0 %v1389
  %1841 = vmatpush.bf16.msra.mxu0 %v1388
  %1842 = vmatpush.bf16.msra.mxu0 %v1387
  %1843 = vmatpush.bf16.msra.mxu0 %v1386
  %1844 = vmatpush.bf16.msra.mxu0 %v1385
  %1845 = vmatpush.bf16.msra.mxu0 %v1384
  %1846 = vmatmul.bf16.gmra.mxu0 %v470
  %v1847 = vpop.f32.mrf.mxu0
  %v1848 = vadd.f32 %v1835, %v1847
  %v1849 = vpop.f32.mrf.mxu0
  %1850 = vdwg.mxu0
  %1851 = vmatpush.bf16.msra.mxu0 %v1399
  %1852 = vmatpush.bf16.msra.mxu0 %v1398
  %1853 = vmatpush.bf16.msra.mxu0 %v1397
  %1854 = vmatpush.bf16.msra.mxu0 %v1396
  %1855 = vmatpush.bf16.msra.mxu0 %v1395
  %1856 = vmatpush.bf16.msra.mxu0 %v1394
  %1857 = vmatpush.bf16.msra.mxu0 %v1393
  %1858 = vmatpush.bf16.msra.mxu0 %v1392
  %1859 = vmatmul.bf16.gmra.mxu0 %v471
  %v1860 = vpop.f32.mrf.mxu0
  %v1861 = vadd.f32 %v1848, %v1860
  %v1862 = vpop.f32.mrf.mxu0
  %1863 = vdwg.mxu0
  %1864 = vmatpush.bf16.msra.mxu0 %v1407
  %1865 = vmatpush.bf16.msra.mxu0 %v1406
  %1866 = vmatpush.bf16.msra.mxu0 %v1405
  %1867 = vmatpush.bf16.msra.mxu0 %v1404
  %1868 = vmatpush.bf16.msra.mxu0 %v1403
  %1869 = vmatpush.bf16.msra.mxu0 %v1402
  %1870 = vmatpush.bf16.msra.mxu0 %v1401
  %1871 = vmatpush.bf16.msra.mxu0 %v1400
  %1872 = vmatmul.bf16.gmra.mxu0 %v472
  %v1873 = vpop.f32.mrf.mxu0
  %v1874 = vadd.f32 %v1861, %v1873
  %v1875 = vpop.f32.mrf.mxu0
  %1876 = vdwg.mxu0
  %1877 = vmatpush.bf16.msra.mxu0 %v1415
  %1878 = vmatpush.bf16.msra.mxu0 %v1414
  %1879 = vmatpush.bf16.msra.mxu0 %v1413
  %1880 = vmatpush.bf16.msra.mxu0 %v1412
  %1881 = vmatpush.bf16.msra.mxu0 %v1411
  %1882 = vmatpush.bf16.msra.mxu0 %v1410
  %1883 = vmatpush.bf16.msra.mxu0 %v1409
  %1884 = vmatpush.bf16.msra.mxu0 %v1408
  %1885 = vmatmul.bf16.gmra.mxu0 %v473
  %v1886 = vpop.f32.mrf.mxu0
  %v1887 = vadd.f32 %v1874, %v1886
  %v1888 = vpop.f32.mrf.mxu0
  %1889 = vdwg.mxu0
  %1890 = vmatpush.bf16.msra.mxu0 %v1423
  %1891 = vmatpush.bf16.msra.mxu0 %v1422
  %1892 = vmatpush.bf16.msra.mxu0 %v1421
  %1893 = vmatpush.bf16.msra.mxu0 %v1420
  %1894 = vmatpush.bf16.msra.mxu0 %v1419
  %1895 = vmatpush.bf16.msra.mxu0 %v1418
  %1896 = vmatpush.bf16.msra.mxu0 %v1417
  %1897 = vmatpush.bf16.msra.mxu0 %v1416
  %1898 = vmatmul.bf16.gmra.mxu0 %v474
  %v1899 = vpop.f32.mrf.mxu0
  %v1900 = vadd.f32 %v1887, %v1899
  %v1901 = vpop.f32.mrf.mxu0
  %1902 = vdwg.mxu0
  %1903 = vmatpush.bf16.msra.mxu0 %v1431
  %1904 = vmatpush.bf16.msra.mxu0 %v1430
  %1905 = vmatpush.bf16.msra.mxu0 %v1429
  %1906 = vmatpush.bf16.msra.mxu0 %v1428
  %1907 = vmatpush.bf16.msra.mxu0 %v1427
  %1908 = vmatpush.bf16.msra.mxu0 %v1426
  %1909 = vmatpush.bf16.msra.mxu0 %v1425
  %1910 = vmatpush.bf16.msra.mxu0 %v1424
  %1911 = vmatmul.bf16.gmra.mxu0 %v475
  %v1912 = vpop.f32.mrf.mxu0
  %v1913 = vadd.f32 %v1900, %v1912
  %v1914 = vpop.f32.mrf.mxu0
  %1915 = vdwg.mxu0
  %1916 = vmatpush.bf16.msra.mxu0 %v1439
  %1917 = vmatpush.bf16.msra.mxu0 %v1438
  %1918 = vmatpush.bf16.msra.mxu0 %v1437
  %1919 = vmatpush.bf16.msra.mxu0 %v1436
  %1920 = vmatpush.bf16.msra.mxu0 %v1435
  %1921 = vmatpush.bf16.msra.mxu0 %v1434
  %1922 = vmatpush.bf16.msra.mxu0 %v1433
  %1923 = vmatpush.bf16.msra.mxu0 %v1432
  %1924 = vmatmul.bf16.gmra.mxu0 %v476
  %v1925 = vpop.f32.mrf.mxu0
  %v1926 = vadd.f32 %v1913, %v1925
  %v1927 = vpop.f32.mrf.mxu0
  %1928 = vdwg.mxu0
  %1929 = vmatpush.bf16.msra.mxu0 %v1447
  %1930 = vmatpush.bf16.msra.mxu0 %v1446
  %1931 = vmatpush.bf16.msra.mxu0 %v1445
  %1932 = vmatpush.bf16.msra.mxu0 %v1444
  %1933 = vmatpush.bf16.msra.mxu0 %v1443
  %1934 = vmatpush.bf16.msra.mxu0 %v1442
  %1935 = vmatpush.bf16.msra.mxu0 %v1441
  %1936 = vmatpush.bf16.msra.mxu0 %v1440
  %1937 = vmatmul.bf16.gmra.mxu0 %v477
  %v1938 = vpop.f32.mrf.mxu0
  %v1939 = vadd.f32 %v1926, %v1938
  %v1940 = vpop.f32.mrf.mxu0
  %1941 = vdwg.mxu0
  %1942 = vmatpush.bf16.msra.mxu0 %v1455
  %1943 = vmatpush.bf16.msra.mxu0 %v1454
  %1944 = vmatpush.bf16.msra.mxu0 %v1453
  %1945 = vmatpush.bf16.msra.mxu0 %v1452
  %1946 = vmatpush.bf16.msra.mxu0 %v1451
  %1947 = vmatpush.bf16.msra.mxu0 %v1450
  %1948 = vmatpush.bf16.msra.mxu0 %v1449
  %1949 = vmatpush.bf16.msra.mxu0 %v1448
  %1950 = vmatmul.bf16.gmra.mxu0 %v478
  %v1951 = vpop.f32.mrf.mxu0
  %v1952 = vadd.f32 %v1939, %v1951
  %v1953 = vpop.f32.mrf.mxu0
  %1954 = vdwg.mxu0
  %1955 = vmatpush.bf16.msra.mxu0 %v1463
  %1956 = vmatpush.bf16.msra.mxu0 %v1462
  %1957 = vmatpush.bf16.msra.mxu0 %v1461
  %1958 = vmatpush.bf16.msra.mxu0 %v1460
  %1959 = vmatpush.bf16.msra.mxu0 %v1459
  %1960 = vmatpush.bf16.msra.mxu0 %v1458
  %1961 = vmatpush.bf16.msra.mxu0 %v1457
  %1962 = vmatpush.bf16.msra.mxu0 %v1456
  %1963 = vmatmul.bf16.gmra.mxu0 %v479
  %v1964 = vpop.f32.mrf.mxu0
  %v1965 = vadd.f32 %v1952, %v1964
  %v1966 = vpop.f32.mrf.mxu0
  %1967 = vdwg.mxu0
  %v1968 = vmax.f32 %v1965, 0.0
  %v1969 = vpack.c.bf16 %v1968, %v1968
  %v1970 = vld [vmem:[%s3] sm:$0xf]
  %v1971 = vld [vmem:[%s3 + $0x4] sm:$0xf]
  %v1972 = vld [vmem:[%s3 + $0x8] sm:$0xf]
  %v1973 = vld [vmem:[%s3 + $0xc] sm:$0xf]
  %v1974 = vld [vmem:[%s3 + $0x10] sm:$0xf]
  %v1975 = vld [vmem:[%s3 + $0x14] sm:$0xf]
  %v1976 = vld [vmem:[%s3 + $0x18] sm:$0xf]
  %v1977 = vld [vmem:[%s3 + $0x1c] sm:$0xf]
  %v1978 = vld [vmem:[%s3 + $0x20] sm:$0xf]
  %v1979 = vld [vmem:[%s3 + $0x24] sm:$0xf]
  %v1980 = vld [vmem:[%s3 + $0x28] sm:$0xf]
  %v1981 = vld [vmem:[%s3 + $0x2c] sm:$0xf]
  %v1982 = vld [vmem:[%s3 + $0x30] sm:$0xf]
  %v1983 = vld [vmem:[%s3 + $0x34] sm:$0xf]
  %v1984 = vld [vmem:[%s3 + $0x38] sm:$0xf]
  %v1985 = vld [vmem:[%s3 + $0x3c] sm:$0xf]
  %v1986 = vld [vmem:[%s4] sm:$0x1]
  %v1988 = vperm.slane %v1986, 0
  %v2006 = vunpack.c.l.b16 %v1970
  %v2007 = vunpack.c.l.b16 %v1971
  %v2008 = vunpack.c.l.b16 %v1972
  %v2009 = vunpack.c.l.b16 %v1973
  %v2010 = vunpack.c.l.b16 %v1974
  %v2011 = vunpack.c.l.b16 %v1975
  %v2012 = vunpack.c.l.b16 %v1976
  %v2013 = vunpack.c.l.b16 %v1977
  %v2014 = vunpack.c.l.b16 %v1978
  %v2015 = vunpack.c.l.b16 %v1979
  %v2016 = vunpack.c.l.b16 %v1980
  %v2017 = vunpack.c.l.b16 %v1981
  %v2018 = vunpack.c.l.b16 %v1982
  %v2019 = vunpack.c.l.b16 %v1983
  %v2020 = vunpack.c.l.b16 %v1984
  %v2021 = vunpack.c.l.b16 %v1985
  %v2022 = vpack.c.b16 %v2007, %v2006
  %v2023 = vpack.c.b16 %v2009, %v2008
  %v2024 = vpack.c.b16 %v2011, %v2010
  %v2025 = vpack.c.b16 %v2013, %v2012
  %v2026 = vpack.c.b16 %v2015, %v2014
  %v2027 = vpack.c.b16 %v2017, %v2016
  %v2028 = vpack.c.b16 %v2019, %v2018
  %v2029 = vpack.c.b16 %v2021, %v2020
  %2038 = vmatpush.bf16.msra.mxu0 %v2029
  %2039 = vmatpush.bf16.msra.mxu0 %v2028
  %2040 = vmatpush.bf16.msra.mxu0 %v2027
  %2041 = vmatpush.bf16.msra.mxu0 %v2026
  %2042 = vmatpush.bf16.msra.mxu0 %v2025
  %2043 = vmatpush.bf16.msra.mxu0 %v2024
  %2044 = vmatpush.bf16.msra.mxu0 %v2023
  %2045 = vmatpush.bf16.msra.mxu0 %v2022
  %2046 = vmatmul.bf16.gmra.mxu0 %v1969
  %v2047 = vpop.f32.mrf.mxu0
  %v2048 = vadd.f32 %v1988, %v2047
  %v2049 = vpop.f32.mrf.mxu0
  %2050 = vdwg.mxu0
  %2051 = vst [vmem:[%s5] sm:$0xff] %v2048
  // Predicated region
  $region22: #{net1_forward.1} parent=0 // pred_check
    _
  $region23: #{net1_forward.1} parent=0 // pred_check_branch
    %2053 = sbr.rel (0) target = $region25
  $region24: #{net1_forward.1} parent=0 // pred_region
    _
  $region25: #{net1_forward.1} parent=0 // pred_fallthru
    _
  // Predicated region
  $region26: #{net1_forward.1} parent=0 // pred_check
    _
  $region27: #{net1_forward.1} parent=0 // pred_check_branch
    %2055 = sbr.rel (0) target = $region29
  $region28: #{net1_forward.1} parent=0 // pred_region
    _
  $region29: #{net1_forward.1} parent=0 // pred_fallthru
    _

</llo_original>
